<compile_context>
chip_gen: v5e
topology: v5e:2x2
jax: 0.10.0
libtpu: 0.0.40
codegen_flags: <defaults>
</compile_context>

<pallas_src>
import functools

import jax
import jax.numpy as jnp
from jax import lax
from jax.experimental import pallas as pl
from jax.experimental.pallas import tpu as pltpu

EPS = 1e-5
BN_INV = (1.0 + EPS) ** -0.5      # 1/sqrt(running_var + eps) with var == 1
LANES = 128
SUBLANES = 8


def _round_up(x, m):
    return (x + m - 1) // m * m


# ---------------------------------------------------------------------------
# Fused Pallas kernel
# ---------------------------------------------------------------------------
def _basic_block_kernel(*refs, wo, rb, rc, cin, p_out, pad_rows, tap_conv1):
    """conv1(+bn1)+relu -> VMEM scratch -> conv2(+bn2) + shortcut -> relu.

    One grid step handles `rb` output pixels (whole samples), processed in
    row-chunks of `rc` to bound live vector-register pressure.  The output is
    stored channel-major (p_out, rb): dense lanes, zero padding waste.
    """
    if tap_conv1:
        x_ref, w1_ref, w2_ref, sc_ref, m_ref, o_ref, xs_ref, y1_ref = refs
    else:
        p1_ref, w1_ref, w2_ref, sc_ref, m_ref, o_ref, y1_ref = refs

    ppad = w2_ref.shape[-1]
    offs = [((t // 3) - 1) * wo + ((t % 3) - 1) for t in range(9)]
    n_chunks = rb // rc

    # Zero only the gutters (the body is fully overwritten below).  Gutter
    # values reach the matmuls multiplied by a 0.0 mask, so they just need to
    # be finite zeros (multiply-masking, not select).
    y1_ref[0:pad_rows, :] = jnp.zeros((pad_rows, ppad), jnp.float32)
    y1_ref[pad_rows + rb:pad_rows + rb + pad_rows, :] = jnp.zeros(
        (pad_rows, ppad), jnp.float32)
    if tap_conv1:
        xs_ref[0:pad_rows, :] = jnp.zeros((pad_rows, cin), jnp.float32)
        xs_ref[pad_rows + rb:pad_rows + rb + pad_rows, :] = jnp.zeros(
            (pad_rows, cin), jnp.float32)
        # Copy the raw input block into the framed scratch, chunk by chunk.
        for c in range(n_chunks):
            r0 = c * rc
            xs_ref[pad_rows + r0:pad_rows + r0 + rc, :] = (
                x_ref[r0:r0 + rc, :].astype(jnp.float32))

    def masked_taps_matmul(src_ref, w3_ref, r0):
        """sum_t dot(mask_t * src[r0+d_t : r0+d_t+rc], W_t), f32 accumulate."""
        acc = jnp.zeros((rc, ppad), jnp.float32)
        for t in range(9):
            d = offs[t]
            tap = src_ref[pad_rows + r0 + d:pad_rows + r0 + d + rc, :]
            mask = m_ref[r0:r0 + rc, t:t + 1].astype(jnp.float32)
            tap = (tap * mask).astype(jnp.bfloat16)
            acc = acc + jnp.dot(tap, w3_ref[t],
                                preferred_element_type=jnp.float32)
        return acc

    # ---- pass 1: conv1 (+ folded BN1) + ReLU -> y1 scratch (f32) -----------
    for c in range(n_chunks):
        r0 = c * rc
        if tap_conv1:
            y1c = masked_taps_matmul(xs_ref, w1_ref, r0)
        else:
            y1c = jnp.dot(p1_ref[r0:r0 + rc, :], w1_ref[...],
                          preferred_element_type=jnp.float32)
        y1_ref[pad_rows + r0:pad_rows + r0 + rc, :] = jnp.maximum(y1c, 0.0)

    # ---- pass 2: conv2 (+ folded BN2) + shortcut + ReLU -> dense output ----
    for c in range(n_chunks):
        r0 = c * rc
        acc = masked_taps_matmul(y1_ref, w2_ref, r0)
        # Shortcut comes straight from the conv1 input stream (its centre
        # tap); sc_ref is the folded 1x1 projection or a padded identity, so
        # no separate shortcut operand is DMA'd and no lane slicing is needed.
        if tap_conv1:
            ctr = x_ref[r0:r0 + rc, :]
        else:
            ctr = p1_ref[r0:r0 + rc, :]
        acc = acc + jnp.dot(ctr, sc_ref[...],
                            preferred_element_type=jnp.float32)
        res_t = jnp.maximum(acc, 0.0).T             # (ppad, rc): ch -> sublanes
        o_ref[:, r0:r0 + rc] = res_t[0:p_out, :]    # dense, unmasked stores


# ---------------------------------------------------------------------------
# pallas_call wrapper
# ---------------------------------------------------------------------------
def _num_tensorcores():
    """Best-effort TensorCore count (v7x / megacore have 2; v5e/v6e have 1)."""
    try:
        dev = jax.devices()[0]
    except Exception:  # pragma: no cover
        return 1
    for attr in ("num_cores", "core_count"):
        v = getattr(dev, attr, None)
        if isinstance(v, int) and v > 0:
            return v
    kind = str(getattr(dev, "device_kind", "")).lower()
    if any(s in kind for s in ("v4", "v5p", "v7")):
        return 2
    return 1


def _choose_samples_per_block(n, hw, num_tc, target_rows=1024):
    """Largest legal rows/step <= target; >=2 parallel steps only on multi-TC.

    Legality: with >1 grid step the (p_out, rb) output block needs rb % 128
    == 0; a single grid step (nb == n) is always legal (full-extent block).
    """
    legal = [d for d in range(1, n + 1)
             if n % d == 0 and (d == n or (d * hw) % 128 == 0)]
    fitting = [d for d in legal if d * hw <= target_rows] or [min(legal)]
    nb = max(fitting)
    if num_tc >= 2 and n // nb < 2:
        two_step = [d for d in fitting if n // d >= 2]
        if two_step:
            nb = max(two_step)
    return nb


def _fused_basic_block(conv1_in, prep, masks, *, n, ho, wo, p_out, rb,
                       tap_conv1):
    hw = ho * wo
    rows_total = n * hw
    rc = 128 if rb % 128 == 0 else rb
    pad_rows = _round_up(wo + 1, SUBLANES)
    scr_rows = rb + 2 * pad_rows
    cin = prep["cin"]
    ppad = prep["w2t"].shape[-1]
    w1 = prep["w1t"] if tap_conv1 else prep["w1m"]

    kern = functools.partial(_basic_block_kernel, wo=wo, rb=rb, rc=rc, cin=cin,
                             p_out=p_out, pad_rows=pad_rows,
                             tap_conv1=tap_conv1)

    # Grid-invariant operands (weights, shortcut matrix, tap masks) use a
    # constant index_map; their footprint is tiny at these channel counts.
    in_specs = [
        pl.BlockSpec((rb, conv1_in.shape[1]), lambda i: (i, 0)),
        pl.BlockSpec(w1.shape,
                     (lambda i: (0, 0, 0)) if w1.ndim == 3
                     else (lambda i: (0, 0))),
        pl.BlockSpec(prep["w2t"].shape, lambda i: (0, 0, 0)),
        pl.BlockSpec(prep["scm"].shape, lambda i: (0, 0)),
        pl.BlockSpec(masks.shape, lambda i: (0, 0)),
    ]
    args = [conv1_in, w1, prep["w2t"], prep["scm"], masks]

    scratch = ([pltpu.VMEM((scr_rows, cin), jnp.float32)] if tap_conv1
               else []) + [pltpu.VMEM((scr_rows, ppad), jnp.float32)]

    # Honest VMEM budget: double-buffered streamed blocks + (double-buffered)
    # grid-invariant operands + scratch, capped at 40 MiB (v7x-safe).
    def _nbytes(a):
        return a.size * a.dtype.itemsize
    wbytes = (_nbytes(w1) + _nbytes(prep["w2t"]) + _nbytes(prep["scm"])
              + _nbytes(masks))
    blk_bytes = (rb * conv1_in.shape[1] * conv1_in.dtype.itemsize
                 + p_out * rb * 4)
    scr_bytes = scr_rows * ppad * 4 + (scr_rows * cin * 4 if tap_conv1 else 0)
    footprint = 2 * blk_bytes + 2 * wbytes + scr_bytes
    vmem_limit = int(min(40 << 20, max(16 << 20, 2 * footprint)))

    return pl.pallas_call(
        kern,
        out_shape=jax.ShapeDtypeStruct((p_out, rows_total), jnp.float32),
        grid_spec=pltpu.PrefetchScalarGridSpec(
            num_scalar_prefetch=0,
            grid=(rows_total // rb,),
            in_specs=in_specs,
            out_specs=pl.BlockSpec((p_out, rb), lambda i: (0, i)),
            scratch_shapes=scratch),
        compiler_params=pltpu.CompilerParams(
            dimension_semantics=("parallel",),
            vmem_limit_bytes=vmem_limit),
    )(*args)


# ---------------------------------------------------------------------------
# Glue: im2col (stride-2 conv1 only), init, BN folding, mask build, forward
# ---------------------------------------------------------------------------
def im2col_3x3(x_nhwc, stride):
    """(N,H,W,C) -> (N*Ho*Wo, 9*C) patches, taps ordered (dy, dx, c)."""
    n, h, w, c = x_nhwc.shape
    ho = (h + 2 - 3) // stride + 1
    wo = (w + 2 - 3) // stride + 1
    xp = jnp.pad(x_nhwc, ((0, 0), (1, 1), (1, 1), (0, 0)))
    cols = []
    for dy in range(3):
        for dx in range(3):
            cols.append(xp[:, dy:dy + stride * (ho - 1) + 1:stride,
                           dx:dx + stride * (wo - 1) + 1:stride, :])
    patches = jnp.concatenate(cols, axis=-1)          # (N, Ho, Wo, 9C)
    return patches.reshape(n * ho * wo, 9 * c), ho, wo


def build_tap_masks(nb, ho, wo):
    """(nb*Ho*Wo, 16) bf16: column t is 1.0 where 3x3 tap t stays in-bounds."""
    ii = jnp.arange(ho).reshape(ho, 1)
    jj = jnp.arange(wo).reshape(1, wo)
    cols = []
    for t in range(9):
        oy, ox = t // 3 - 1, t % 3 - 1
        v = ((ii + oy >= 0) & (ii + oy < ho) & (jj + ox >= 0) & (jj + ox < wo))
        cols.append(v.reshape(ho * wo))
    m = jnp.stack(cols, axis=-1).astype(jnp.bfloat16)     # (HW, 9)
    m = jnp.tile(m, (nb, 1))                              # (nb*HW, 9)
    return jnp.pad(m, ((0, 0), (0, 16 - 9)))              # lane-pad to 16


def kaiming_normal(key, shape_oihw):
    o, i, kh, kw = shape_oihw
    std = (2.0 / (i * kh * kw)) ** 0.5
    return std * jax.random.normal(key, shape_oihw, dtype=jnp.float32)


def init_basic_block(key, in_planes, planes, stride, bn_weight):
    k1, k2, k3 = jax.random.split(key, 3)
    params = {"w1": kaiming_normal(k1, (planes, in_planes, 3, 3)),
              "w2": kaiming_normal(k2, (planes, planes, 3, 3)),
              "g1": jnp.float32(1.0),           # bn1.weight
              "g2": jnp.float32(bn_weight)}     # bn2.weight
    if stride != 1 or in_planes != planes:
        params["w_sc"] = kaiming_normal(k3, (planes, in_planes, 1, 1))
        params["g_sc"] = jnp.float32(1.0)       # shortcut BN weight
    return params


def prepare_block_params(params, tap_conv1):
    """Fold inference-mode BN into the conv weights, tap-major layout,
    output channels zero-padded to 128 lanes, cast to bf16."""
    planes, cin = params["w1"].shape[0], params["w1"].shape[1]
    ppad = _round_up(planes, LANES)

    w1t = jnp.transpose(params["w1"], (2, 3, 1, 0)).reshape(9, cin, planes)
    w1t = w1t * (params["g1"] * BN_INV)
    w1t = jnp.pad(w1t, ((0, 0), (0, 0), (0, ppad - planes))).astype(jnp.bfloat16)

    w2t = jnp.transpose(params["w2"], (2, 3, 1, 0)).reshape(9, planes, planes)
    w2t = w2t * (params["g2"] * BN_INV)
    w2t = jnp.pad(w2t, ((0, 0), (0, ppad - planes),
                        (0, ppad - planes))).astype(jnp.bfloat16)

    # Shortcut matrix multiplies the conv1 input stream's centre tap: the
    # folded 1x1 projection (+BN) or -- identity shortcut -- an eye(cin).
    if "w_sc" in params:
        scm = params["w_sc"][:, :, 0, 0].T * (params["g_sc"] * BN_INV)
    else:
        scm = jnp.eye(cin, dtype=jnp.float32)           # cin == planes here
    scm = jnp.pad(scm, ((0, 0), (0, ppad - planes)))
    if not tap_conv1:
        # conv1 input is the im2col patch (9*cin wide); embed the shortcut
        # matrix at the centre-tap rows so the kernel needs no lane slicing.
        big = jnp.zeros((9 * cin, ppad), jnp.float32)
        big = big.at[4 * cin:5 * cin, :].set(scm)
        scm = big
    scm = scm.astype(jnp.bfloat16)

    prep = {"cin": cin, "w1t": w1t, "w2t": w2t, "scm": scm}
    if not tap_conv1:
        prep["w1m"] = w1t.reshape(9 * cin, ppad)
    return prep, ppad


@functools.partial(jax.jit, static_argnames=("stride",))
def basic_block_forward(x_nchw, params, stride):
    """BasicBlock.forward (drop1/drop2 identity for planes <= 32). NCHW in/out."""
    x = jnp.transpose(x_nchw, (0, 2, 3, 1)).astype(jnp.float32)   # -> NHWC
    n, h, w, cin = x.shape
    planes = params["w1"].shape[0]
    tap_conv1 = (stride == 1)                      # in-kernel conv1 taps
    prep, _ = prepare_block_params(params, tap_conv1)

    if tap_conv1:
        ho, wo = h, w
        conv1_in = x.reshape(n * h * w, cin).astype(jnp.bfloat16)
    else:
        conv1_in, ho, wo = im2col_3x3(x, stride)   # 2.25x inflation only
        conv1_in = conv1_in.astype(jnp.bfloat16)

    hw = ho * wo
    nb = _choose_samples_per_block(n, hw, _num_tensorcores())
    rb = nb * hw
    masks = build_tap_masks(nb, ho, wo)
    p_out = _round_up(planes, SUBLANES)

    out = _fused_basic_block(conv1_in, prep, masks, n=n, ho=ho, wo=wo,
                             p_out=p_out, rb=rb, tap_conv1=tap_conv1)
    # Dense channel-major output -> NCHW (small, dense reshape/transpose).
    out = out[:planes].reshape(planes, n, ho, wo)
    return jnp.transpose(out, (1, 0, 2, 3))


# ---------------------------------------------------------------------------
# Reference: lax convs with the same folded-BN bf16 weights / bf16 matmul
# inputs (f32 accumulation) -> differs from the kernel only by summation order.
# ---------------------------------------------------------------------------
def reference_forward(x_nchw, params, stride):
    x = jnp.transpose(x_nchw, (0, 2, 3, 1)).astype(jnp.float32)
    xb = x.astype(jnp.bfloat16)
    dn = ("NHWC", "HWIO", "NHWC")
    w1 = (jnp.transpose(params["w1"], (2, 3, 1, 0)) *
          (params["g1"] * BN_INV)).astype(jnp.bfloat16)
    w2 = (jnp.transpose(params["w2"], (2, 3, 1, 0)) *
          (params["g2"] * BN_INV)).astype(jnp.bfloat16)
    out = lax.conv_general_dilated(xb, w1, (stride, stride), [(1, 1), (1, 1)],
                                   dimension_numbers=dn,
                                   preferred_element_type=jnp.float32)
    out = jnp.maximum(out, 0.0)
    out = lax.conv_general_dilated(out.astype(jnp.bfloat16), w2, (1, 1),
                                   [(1, 1), (1, 1)], dimension_numbers=dn,
                                   preferred_element_type=jnp.float32)
    if "w_sc" in params:
        wsc = (jnp.transpose(params["w_sc"], (2, 3, 1, 0)) *
               (params["g_sc"] * BN_INV)).astype(jnp.bfloat16)
        sc = lax.conv_general_dilated(xb, wsc, (stride, stride),
                                      [(0, 0), (0, 0)], dimension_numbers=dn,
                                      preferred_element_type=jnp.float32)
    else:
        sc = xb.astype(jnp.float32)   # kernel's identity shortcut is the bf16 stream
    out = jnp.maximum(out + sc, 0.0)
    return jnp.transpose(out, (0, 3, 1, 2))


# ---------------------------------------------------------------------------
if __name__ == "__main__":
    key = jax.random.PRNGKey(0)
    kx1, kp1, kx2, kp2 = jax.random.split(key, 4)

    # Projection-shortcut config: BasicBlock(4, 8, stride=2, bn_weight=0.5,
    # drop_rate=0.1, theta='dropout') -> drop layers identity (planes <= 32).
    in_planes, planes, stride, bn_weight = 4, 8, 2, 0.5
    x = jax.random.normal(kx1, (2, in_planes, 16, 16), dtype=jnp.float32)
    params = init_basic_block(kp1, in_planes, planes, stride, bn_weight)
    out = jax.block_until_ready(basic_block_forward(x, params, stride))
    ref = reference_forward(x, params, stride)
    assert out.shape == ref.shape == (2, planes, 8, 8)
    err = float(jnp.max(jnp.abs(out - ref)))
    assert jnp.allclose(out, ref, rtol=2e-3, atol=2e-3), f"max err {err}"

    # Identity-shortcut config (stride=1, in_planes == planes) exercises the
    # in-kernel shifted-tap conv1 path and the identity shortcut matrix.
    x2 = jax.random.normal(kx2, (2, 8, 16, 16), dtype=jnp.float32)
    params2 = init_basic_block(kp2, 8, 8, 1, bn_weight)
    out2 = jax.block_until_ready(basic_block_forward(x2, params2, 1))
    ref2 = reference_forward(x2, params2, 1)
    assert out2.shape == ref2.shape == (2, 8, 16, 16)
    err2 = float(jnp.max(jnp.abs(out2 - ref2)))
    assert jnp.allclose(out2, ref2, rtol=2e-3, atol=2e-3), f"max err {err2}"

    print("KERNEL_OK")
</pallas_src>

<mosaic_0001>
module attributes {stable_mosaic.version = 11 : i64} {
  func.func @_basic_block_kernel(%arg0: i32, %arg1: memref<128x36xbf16, #tpu.memory_space<vmem>>, %arg2: memref<36x128xbf16, #tpu.memory_space<vmem>>, %arg3: memref<9x128x128xbf16, #tpu.memory_space<vmem>>, %arg4: memref<36x128xbf16, #tpu.memory_space<vmem>>, %arg5: memref<128x16xbf16, #tpu.memory_space<vmem>>, %arg6: memref<8x128xf32, #tpu.memory_space<vmem>>, %arg7: memref<160x128xf32, #tpu.memory_space<vmem>>) attributes {dimension_semantics = [#tpu.dimension_semantics<parallel>], iteration_bounds = array<i64: 1>, scalar_prefetch = 0 : i64, scratch_operands = 1 : i64, tpu.core_type = #tpu.core_type<tc>, window_params = [{transform_indices = @transform_0, window_bounds = array<i64: 128, 36>}, {pipeline_mode = #tpu.pipeline_mode<synchronous>, transform_indices = @transform_1, window_bounds = array<i64: 36, 128>}, {pipeline_mode = #tpu.pipeline_mode<synchronous>, transform_indices = @transform_2, window_bounds = array<i64: 9, 128, 128>}, {pipeline_mode = #tpu.pipeline_mode<synchronous>, transform_indices = @transform_3, window_bounds = array<i64: 36, 128>}, {pipeline_mode = #tpu.pipeline_mode<synchronous>, transform_indices = @transform_4, window_bounds = array<i64: 128, 16>}, {transform_indices = @transform_5, window_bounds = array<i64: 8, 128>}]} {
    %cst = arith.constant 0.000000e+00 : f32
    %0 = vector.broadcast %cst : f32 to vector<16x128xf32>
    %c0 = arith.constant 0 : index
    %c0_0 = arith.constant 0 : index
    %1 = vector.load %arg7[%c0, %c0_0] : memref<160x128xf32, #tpu.memory_space<vmem>>, vector<16x128xf32>
    tpu.vector_store %arg7[%c0, %c0_0], %0 {strides = array<i32>} : memref<160x128xf32, #tpu.memory_space<vmem>>, vector<16x128xf32>,
    %cst_1 = arith.constant 0.000000e+00 : f32
    %2 = vector.broadcast %cst_1 : f32 to vector<16x128xf32>
    %c144 = arith.constant 144 : index
    %c0_2 = arith.constant 0 : index
    %3 = vector.load %arg7[%c144, %c0_2] : memref<160x128xf32, #tpu.memory_space<vmem>>, vector<16x128xf32>
    tpu.vector_store %arg7[%c144, %c0_2], %2 {strides = array<i32>} : memref<160x128xf32, #tpu.memory_space<vmem>>, vector<16x128xf32>,
    %c0_3 = arith.constant 0 : index
    %c0_4 = arith.constant 0 : index
    %4 = vector.load %arg1[%c0_3, %c0_4] : memref<128x36xbf16, #tpu.memory_space<vmem>>, vector<128x36xbf16>
    %c0_5 = arith.constant 0 : index
    %c0_6 = arith.constant 0 : index
    %5 = vector.load %arg2[%c0_5, %c0_6] : memref<36x128xbf16, #tpu.memory_space<vmem>>, vector<36x128xbf16>
    %cst_7 = arith.constant dense<0.000000e+00> : vector<128x128xf32>
    %6 = tpu.matmul %4, %5, %cst_7 {dimension_numbers = #tpu.dot_dimension_numbers<[1], [0], [0], [1], [0, 0, 1, 1], [], []>} : vector<128x36xbf16>, vector<36x128xbf16>, vector<128x128xf32> -> vector<128x128xf32>
    %cst_8 = arith.constant 0.000000e+00 : f32
    %7 = vector.broadcast %cst_8 : f32 to vector<128x128xf32>
    %8 = arith.maximumf %6, %7 : vector<128x128xf32>
    %c16 = arith.constant 16 : index
    %c0_9 = arith.constant 0 : index
    %9 = vector.load %arg7[%c16, %c0_9] : memref<160x128xf32, #tpu.memory_space<vmem>>, vector<128x128xf32>
    tpu.vector_store %arg7[%c16, %c0_9], %8 {strides = array<i32>} : memref<160x128xf32, #tpu.memory_space<vmem>>, vector<128x128xf32>,
    %cst_10 = arith.constant 0.000000e+00 : f32
    %10 = vector.broadcast %cst_10 : f32 to vector<128x128xf32>
    %c7 = arith.constant 7 : index
    %c0_11 = arith.constant 0 : index
    %11 = vector.load %arg7[%c7, %c0_11] : memref<160x128xf32, #tpu.memory_space<vmem>>, vector<128x128xf32>
    %c0_12 = arith.constant 0 : index
    %c0_13 = arith.constant 0 : index
    %12 = vector.load %arg5[%c0_12, %c0_13] : memref<128x16xbf16, #tpu.memory_space<vmem>>, vector<128x1xbf16>
    %13 = arith.extf %12 : vector<128x1xbf16> to vector<128x1xf32>
    %14 = vector.broadcast %13 : vector<128x1xf32> to vector<128x128xf32>
    %15 = arith.mulf %11, %14 : vector<128x128xf32>
    %16 = arith.truncf %15 : vector<128x128xf32> to vector<128x128xbf16>
    %c0_14 = arith.constant 0 : index
    %c0_15 = arith.constant 0 : index
    %c0_16 = arith.constant 0 : index
    %17 = vector.load %arg3[%c0_14, %c0_15, %c0_16] : memref<9x128x128xbf16, #tpu.memory_space<vmem>>, vector<1x128x128xbf16>
    %18 = vector.shape_cast %17 : vector<1x128x128xbf16> to vector<128x128xbf16>
    %cst_17 = arith.constant dense<0.000000e+00> : vector<128x128xf32>
    %19 = tpu.matmul %16, %18, %cst_17 {dimension_numbers = #tpu.dot_dimension_numbers<[1], [0], [0], [1], [0, 0, 1, 1], [], []>} : vector<128x128xbf16>, vector<128x128xbf16>, vector<128x128xf32> -> vector<128x128xf32>
    %20 = arith.addf %10, %19 : vector<128x128xf32>
    %c8 = arith.constant 8 : index
    %c0_18 = arith.constant 0 : index
    %21 = vector.load %arg7[%c8, %c0_18] : memref<160x128xf32, #tpu.memory_space<vmem>>, vector<128x128xf32>
    %c0_19 = arith.constant 0 : index
    %c1 = arith.constant 1 : index
    %22 = vector.load %arg5[%c0_19, %c1] : memref<128x16xbf16, #tpu.memory_space<vmem>>, vector<128x1xbf16>
    %23 = arith.extf %22 : vector<128x1xbf16> to vector<128x1xf32>
    %24 = vector.broadcast %23 : vector<128x1xf32> to vector<128x128xf32>
    %25 = arith.mulf %21, %24 : vector<128x128xf32>
    %26 = arith.truncf %25 : vector<128x128xf32> to vector<128x128xbf16>
    %c1_20 = arith.constant 1 : index
    %c0_21 = arith.constant 0 : index
    %c0_22 = arith.constant 0 : index
    %27 = vector.load %arg3[%c1_20, %c0_21, %c0_22] : memref<9x128x128xbf16, #tpu.memory_space<vmem>>, vector<1x128x128xbf16>
    %28 = vector.shape_cast %27 : vector<1x128x128xbf16> to vector<128x128xbf16>
    %cst_23 = arith.constant dense<0.000000e+00> : vector<128x128xf32>
    %29 = tpu.matmul %26, %28, %cst_23 {dimension_numbers = #tpu.dot_dimension_numbers<[1], [0], [0], [1], [0, 0, 1, 1], [], []>} : vector<128x128xbf16>, vector<128x128xbf16>, vector<128x128xf32> -> vector<128x128xf32>
    %30 = arith.addf %20, %29 : vector<128x128xf32>
    %c9 = arith.constant 9 : index
    %c0_24 = arith.constant 0 : index
    %31 = vector.load %arg7[%c9, %c0_24] : memref<160x128xf32, #tpu.memory_space<vmem>>, vector<128x128xf32>
    %c0_25 = arith.constant 0 : index
    %c2 = arith.constant 2 : index
    %32 = vector.load %arg5[%c0_25, %c2] : memref<128x16xbf16, #tpu.memory_space<vmem>>, vector<128x1xbf16>
    %33 = arith.extf %32 : vector<128x1xbf16> to vector<128x1xf32>
    %34 = vector.broadcast %33 : vector<128x1xf32> to vector<128x128xf32>
    %35 = arith.mulf %31, %34 : vector<128x128xf32>
    %36 = arith.truncf %35 : vector<128x128xf32> to vector<128x128xbf16>
    %c2_26 = arith.constant 2 : index
    %c0_27 = arith.constant 0 : index
    %c0_28 = arith.constant 0 : index
    %37 = vector.load %arg3[%c2_26, %c0_27, %c0_28] : memref<9x128x128xbf16, #tpu.memory_space<vmem>>, vector<1x128x128xbf16>
    %38 = vector.shape_cast %37 : vector<1x128x128xbf16> to vector<128x128xbf16>
    %cst_29 = arith.constant dense<0.000000e+00> : vector<128x128xf32>
    %39 = tpu.matmul %36, %38, %cst_29 {dimension_numbers = #tpu.dot_dimension_numbers<[1], [0], [0], [1], [0, 0, 1, 1], [], []>} : vector<128x128xbf16>, vector<128x128xbf16>, vector<128x128xf32> -> vector<128x128xf32>
    %40 = arith.addf %30, %39 : vector<128x128xf32>
    %c15 = arith.constant 15 : index
    %c0_30 = arith.constant 0 : index
    %41 = vector.load %arg7[%c15, %c0_30] : memref<160x128xf32, #tpu.memory_space<vmem>>, vector<128x128xf32>
    %c0_31 = arith.constant 0 : index
    %c3 = arith.constant 3 : index
    %42 = vector.load %arg5[%c0_31, %c3] : memref<128x16xbf16, #tpu.memory_space<vmem>>, vector<128x1xbf16>
    %43 = arith.extf %42 : vector<128x1xbf16> to vector<128x1xf32>
    %44 = vector.broadcast %43 : vector<128x1xf32> to vector<128x128xf32>
    %45 = arith.mulf %41, %44 : vector<128x128xf32>
    %46 = arith.truncf %45 : vector<128x128xf32> to vector<128x128xbf16>
    %c3_32 = arith.constant 3 : index
    %c0_33 = arith.constant 0 : index
    %c0_34 = arith.constant 0 : index
    %47 = vector.load %arg3[%c3_32, %c0_33, %c0_34] : memref<9x128x128xbf16, #tpu.memory_space<vmem>>, vector<1x128x128xbf16>
    %48 = vector.shape_cast %47 : vector<1x128x128xbf16> to vector<128x128xbf16>
    %cst_35 = arith.constant dense<0.000000e+00> : vector<128x128xf32>
    %49 = tpu.matmul %46, %48, %cst_35 {dimension_numbers = #tpu.dot_dimension_numbers<[1], [0], [0], [1], [0, 0, 1, 1], [], []>} : vector<128x128xbf16>, vector<128x128xbf16>, vector<128x128xf32> -> vector<128x128xf32>
    %50 = arith.addf %40, %49 : vector<128x128xf32>
    %c16_36 = arith.constant 16 : index
    %c0_37 = arith.constant 0 : index
    %51 = vector.load %arg7[%c16_36, %c0_37] : memref<160x128xf32, #tpu.memory_space<vmem>>, vector<128x128xf32>
    %c0_38 = arith.constant 0 : index
    %c4 = arith.constant 4 : index
    %52 = vector.load %arg5[%c0_38, %c4] : memref<128x16xbf16, #tpu.memory_space<vmem>>, vector<128x1xbf16>
    %53 = arith.extf %52 : vector<128x1xbf16> to vector<128x1xf32>
    %54 = vector.broadcast %53 : vector<128x1xf32> to vector<128x128xf32>
    %55 = arith.mulf %51, %54 : vector<128x128xf32>
    %56 = arith.truncf %55 : vector<128x128xf32> to vector<128x128xbf16>
    %c4_39 = arith.constant 4 : index
    %c0_40 = arith.constant 0 : index
    %c0_41 = arith.constant 0 : index
    %57 = vector.load %arg3[%c4_39, %c0_40, %c0_41] : memref<9x128x128xbf16, #tpu.memory_space<vmem>>, vector<1x128x128xbf16>
    %58 = vector.shape_cast %57 : vector<1x128x128xbf16> to vector<128x128xbf16>
    %cst_42 = arith.constant dense<0.000000e+00> : vector<128x128xf32>
    %59 = tpu.matmul %56, %58, %cst_42 {dimension_numbers = #tpu.dot_dimension_numbers<[1], [0], [0], [1], [0, 0, 1, 1], [], []>} : vector<128x128xbf16>, vector<128x128xbf16>, vector<128x128xf32> -> vector<128x128xf32>
    %60 = arith.addf %50, %59 : vector<128x128xf32>
    %c17 = arith.constant 17 : index
    %c0_43 = arith.constant 0 : index
    %61 = vector.load %arg7[%c17, %c0_43] : memref<160x128xf32, #tpu.memory_space<vmem>>, vector<128x128xf32>
    %c0_44 = arith.constant 0 : index
    %c5 = arith.constant 5 : index
    %62 = vector.load %arg5[%c0_44, %c5] : memref<128x16xbf16, #tpu.memory_space<vmem>>, vector<128x1xbf16>
    %63 = arith.extf %62 : vector<128x1xbf16> to vector<128x1xf32>
    %64 = vector.broadcast %63 : vector<128x1xf32> to vector<128x128xf32>
    %65 = arith.mulf %61, %64 : vector<128x128xf32>
    %66 = arith.truncf %65 : vector<128x128xf32> to vector<128x128xbf16>
    %c5_45 = arith.constant 5 : index
    %c0_46 = arith.constant 0 : index
    %c0_47 = arith.constant 0 : index
    %67 = vector.load %arg3[%c5_45, %c0_46, %c0_47] : memref<9x128x128xbf16, #tpu.memory_space<vmem>>, vector<1x128x128xbf16>
    %68 = vector.shape_cast %67 : vector<1x128x128xbf16> to vector<128x128xbf16>
    %cst_48 = arith.constant dense<0.000000e+00> : vector<128x128xf32>
    %69 = tpu.matmul %66, %68, %cst_48 {dimension_numbers = #tpu.dot_dimension_numbers<[1], [0], [0], [1], [0, 0, 1, 1], [], []>} : vector<128x128xbf16>, vector<128x128xbf16>, vector<128x128xf32> -> vector<128x128xf32>
    %70 = arith.addf %60, %69 : vector<128x128xf32>
    %c23 = arith.constant 23 : index
    %c0_49 = arith.constant 0 : index
    %71 = vector.load %arg7[%c23, %c0_49] : memref<160x128xf32, #tpu.memory_space<vmem>>, vector<128x128xf32>
    %c0_50 = arith.constant 0 : index
    %c6 = arith.constant 6 : index
    %72 = vector.load %arg5[%c0_50, %c6] : memref<128x16xbf16, #tpu.memory_space<vmem>>, vector<128x1xbf16>
    %73 = arith.extf %72 : vector<128x1xbf16> to vector<128x1xf32>
    %74 = vector.broadcast %73 : vector<128x1xf32> to vector<128x128xf32>
    %75 = arith.mulf %71, %74 : vector<128x128xf32>
    %76 = arith.truncf %75 : vector<128x128xf32> to vector<128x128xbf16>
    %c6_51 = arith.constant 6 : index
    %c0_52 = arith.constant 0 : index
    %c0_53 = arith.constant 0 : index
    %77 = vector.load %arg3[%c6_51, %c0_52, %c0_53] : memref<9x128x128xbf16, #tpu.memory_space<vmem>>, vector<1x128x128xbf16>
    %78 = vector.shape_cast %77 : vector<1x128x128xbf16> to vector<128x128xbf16>
    %cst_54 = arith.constant dense<0.000000e+00> : vector<128x128xf32>
    %79 = tpu.matmul %76, %78, %cst_54 {dimension_numbers = #tpu.dot_dimension_numbers<[1], [0], [0], [1], [0, 0, 1, 1], [], []>} : vector<128x128xbf16>, vector<128x128xbf16>, vector<128x128xf32> -> vector<128x128xf32>
    %80 = arith.addf %70, %79 : vector<128x128xf32>
    %c24 = arith.constant 24 : index
    %c0_55 = arith.constant 0 : index
    %81 = vector.load %arg7[%c24, %c0_55] : memref<160x128xf32, #tpu.memory_space<vmem>>, vector<128x128xf32>
    %c0_56 = arith.constant 0 : index
    %c7_57 = arith.constant 7 : index
    %82 = vector.load %arg5[%c0_56, %c7_57] : memref<128x16xbf16, #tpu.memory_space<vmem>>, vector<128x1xbf16>
    %83 = arith.extf %82 : vector<128x1xbf16> to vector<128x1xf32>
    %84 = vector.broadcast %83 : vector<128x1xf32> to vector<128x128xf32>
    %85 = arith.mulf %81, %84 : vector<128x128xf32>
    %86 = arith.truncf %85 : vector<128x128xf32> to vector<128x128xbf16>
    %c7_58 = arith.constant 7 : index
    %c0_59 = arith.constant 0 : index
    %c0_60 = arith.constant 0 : index
    %87 = vector.load %arg3[%c7_58, %c0_59, %c0_60] : memref<9x128x128xbf16, #tpu.memory_space<vmem>>, vector<1x128x128xbf16>
    %88 = vector.shape_cast %87 : vector<1x128x128xbf16> to vector<128x128xbf16>
    %cst_61 = arith.constant dense<0.000000e+00> : vector<128x128xf32>
    %89 = tpu.matmul %86, %88, %cst_61 {dimension_numbers = #tpu.dot_dimension_numbers<[1], [0], [0], [1], [0, 0, 1, 1], [], []>} : vector<128x128xbf16>, vector<128x128xbf16>, vector<128x128xf32> -> vector<128x128xf32>
    %90 = arith.addf %80, %89 : vector<128x128xf32>
    %c25 = arith.constant 25 : index
    %c0_62 = arith.constant 0 : index
    %91 = vector.load %arg7[%c25, %c0_62] : memref<160x128xf32, #tpu.memory_space<vmem>>, vector<128x128xf32>
    %c0_63 = arith.constant 0 : index
    %c8_64 = arith.constant 8 : index
    %92 = vector.load %arg5[%c0_63, %c8_64] : memref<128x16xbf16, #tpu.memory_space<vmem>>, vector<128x1xbf16>
    %93 = arith.extf %92 : vector<128x1xbf16> to vector<128x1xf32>
    %94 = vector.broadcast %93 : vector<128x1xf32> to vector<128x128xf32>
    %95 = arith.mulf %91, %94 : vector<128x128xf32>
    %96 = arith.truncf %95 : vector<128x128xf32> to vector<128x128xbf16>
    %c8_65 = arith.constant 8 : index
    %c0_66 = arith.constant 0 : index
    %c0_67 = arith.constant 0 : index
    %97 = vector.load %arg3[%c8_65, %c0_66, %c0_67] : memref<9x128x128xbf16, #tpu.memory_space<vmem>>, vector<1x128x128xbf16>
    %98 = vector.shape_cast %97 : vector<1x128x128xbf16> to vector<128x128xbf16>
    %cst_68 = arith.constant dense<0.000000e+00> : vector<128x128xf32>
    %99 = tpu.matmul %96, %98, %cst_68 {dimension_numbers = #tpu.dot_dimension_numbers<[1], [0], [0], [1], [0, 0, 1, 1], [], []>} : vector<128x128xbf16>, vector<128x128xbf16>, vector<128x128xf32> -> vector<128x128xf32>
    %100 = arith.addf %90, %99 : vector<128x128xf32>
    %c0_69 = arith.constant 0 : index
    %c0_70 = arith.constant 0 : index
    %101 = vector.load %arg1[%c0_69, %c0_70] : memref<128x36xbf16, #tpu.memory_space<vmem>>, vector<128x36xbf16>
    %c0_71 = arith.constant 0 : index
    %c0_72 = arith.constant 0 : index
    %102 = vector.load %arg4[%c0_71, %c0_72] : memref<36x128xbf16, #tpu.memory_space<vmem>>, vector<36x128xbf16>
    %cst_73 = arith.constant dense<0.000000e+00> : vector<128x128xf32>
    %103 = tpu.matmul %101, %102, %cst_73 {dimension_numbers = #tpu.dot_dimension_numbers<[1], [0], [0], [1], [0, 0, 1, 1], [], []>} : vector<128x36xbf16>, vector<36x128xbf16>, vector<128x128xf32> -> vector<128x128xf32>
    %104 = arith.addf %100, %103 : vector<128x128xf32>
    %cst_74 = arith.constant 0.000000e+00 : f32
    %105 = vector.broadcast %cst_74 : f32 to vector<128x128xf32>
    %106 = arith.maximumf %104, %105 : vector<128x128xf32>
    %107 = tpu.transpose %106, [1, 0] : vector<128x128xf32> -> vector<128x128xf32>
    %108 = vector.extract_strided_slice %107 {offsets = [0, 0], sizes = [8, 128], strides = [1, 1]} : vector<128x128xf32> to vector<8x128xf32>
    %c0_75 = arith.constant 0 : index
    %c0_76 = arith.constant 0 : index
    %109 = vector.load %arg6[%c0_75, %c0_76] : memref<8x128xf32, #tpu.memory_space<vmem>>, vector<8x128xf32>
    tpu.vector_store %arg6[%c0_75, %c0_76], %108 {strides = array<i32>} : memref<8x128xf32, #tpu.memory_space<vmem>>, vector<8x128xf32>,
    return
  }
  func.func @transform_0(%arg0: i32) -> (i32, i32) {
    %c0_i32 = arith.constant 0 : i32
    %c0_i32_0 = arith.constant 0 : i32
    return %arg0, %c0_i32 : i32, i32
  }
  func.func @transform_1(%arg0: i32) -> (i32, i32) {
    %c0_i32 = arith.constant 0 : i32
    %c0_i32_0 = arith.constant 0 : i32
    %c0_i32_1 = arith.constant 0 : i32
    return %c0_i32, %c0_i32_0 : i32, i32
  }
  func.func @transform_2(%arg0: i32) -> (i32, i32, i32) {
    %c0_i32 = arith.constant 0 : i32
    %c0_i32_0 = arith.constant 0 : i32
    %c0_i32_1 = arith.constant 0 : i32
    %c0_i32_2 = arith.constant 0 : i32
    return %c0_i32, %c0_i32_0, %c0_i32_1 : i32, i32, i32
  }
  func.func @transform_3(%arg0: i32) -> (i32, i32) {
    %c0_i32 = arith.constant 0 : i32
    %c0_i32_0 = arith.constant 0 : i32
    %c0_i32_1 = arith.constant 0 : i32
    return %c0_i32, %c0_i32_0 : i32, i32
  }
  func.func @transform_4(%arg0: i32) -> (i32, i32) {
    %c0_i32 = arith.constant 0 : i32
    %c0_i32_0 = arith.constant 0 : i32
    %c0_i32_1 = arith.constant 0 : i32
    return %c0_i32, %c0_i32_0 : i32, i32
  }
  func.func @transform_5(%arg0: i32) -> (i32, i32) {
    %c0_i32 = arith.constant 0 : i32
    %c0_i32_0 = arith.constant 0 : i32
    return %c0_i32, %arg0 : i32, i32
  }
}

</mosaic_0001>

<llo_original>
// kernel: basic_block_forward.1
$region0: #{basic_block_forward.1}
  #allocation0 [shape = 'u32[]', space=smem, size = 0x4, offset = 0x4, fixed_abs, tag = 'smem constant byte address 0x4 - core index']
  #allocation1 [shape = 'u32[72,128]{1,0:T(1,128)}', space=vmem, size = 0x9000, scoped, tag = 'internal scratch']
  #allocation2 [shape = 'f32[160,128]{1,0:T(8,128)}', space=vmem, size = 0x14000, scoped, tag = 'scratch operand']
  %s0 = inlined_call_operand.vmem [shape: bf16[128,36], index: 0, kind: input, shape index: {}]
  %s1 = inlined_call_operand.vmem [shape: bf16[36,128], index: 1, kind: input, shape index: {}]
  %s2 = inlined_call_operand.vmem [shape: bf16[9,128,128], index: 2, kind: input, shape index: {}]
  %s3 = inlined_call_operand.vmem [shape: bf16[36,128], index: 3, kind: input, shape index: {}]
  %s4 = inlined_call_operand.vmem [shape: bf16[128,16], index: 4, kind: input, shape index: {}]
  %s5 = inlined_call_operand.vmem [shape: f32[8,128], index: 5, kind: output, shape index: {}]
  %s6 = sld [smem:[#allocation0]]
  $region30: #{basic_block_forward.1} parent=0
    _
  %s8 = ssub.s32 1, %s6
  %s9 = scalar_select 0, %s8, %s6
  // Predicated region
  $region2: #{basic_block_forward.1} parent=0 // pred_check
    _
  $region3: #{basic_block_forward.1} parent=0 // pred_check_branch
    %11 = sbr.rel (0) target = $region5
  $region4: #{basic_block_forward.1} parent=0 // pred_region
    _
  $region5: #{basic_block_forward.1} parent=0 // pred_fallthru
    _
  // Predicated region
  $region6: #{basic_block_forward.1} parent=0 // pred_check
    _
  $region7: #{basic_block_forward.1} parent=0 // pred_check_branch
    %13 = sbr.rel (0) target = $region9
  $region8: #{basic_block_forward.1} parent=0 // pred_region
    _
  $region9: #{basic_block_forward.1} parent=0 // pred_fallthru
    _
  // Predicated region
  $region10: #{basic_block_forward.1} parent=0 // pred_check
    _
  $region11: #{basic_block_forward.1} parent=0 // pred_check_branch
    %15 = sbr.rel (0) target = $region13
  $region12: #{basic_block_forward.1} parent=0 // pred_region
    _
  $region13: #{basic_block_forward.1} parent=0 // pred_fallthru
    _
  // Predicated region
  $region14: #{basic_block_forward.1} parent=0 // pred_check
    _
  $region15: #{basic_block_forward.1} parent=0 // pred_check_branch
    %17 = sbr.rel (0) target = $region17
  $region16: #{basic_block_forward.1} parent=0 // pred_region
    _
  $region17: #{basic_block_forward.1} parent=0 // pred_fallthru
    _
  // Predicated region
  $region18: #{basic_block_forward.1} parent=0 // pred_check
    _
  $region19: #{basic_block_forward.1} parent=0 // pred_check_branch
    %19 = sbr.rel (0) target = $region21
  $region20: #{basic_block_forward.1} parent=0 // pred_region
    _
  $region21: #{basic_block_forward.1} parent=0 // pred_fallthru
    _
  %21 = vst [vmem:[#allocation2] sm:$0xff] 0.0
  %22 = vst [vmem:[#allocation2 + $0x8] sm:$0xff] 0.0
  %23 = vst [vmem:[#allocation2 + $0x90] sm:$0xff] 0.0
  %24 = vst [vmem:[#allocation2 + $0x98] sm:$0xff] 0.0
  %v25 = vld [vmem:[%s0] sm:$0xf]
  %v26 = vld [vmem:[%s0 + $0x4] sm:$0xf]
  %v27 = vld [vmem:[%s0 + $0x8] sm:$0xf]
  %v28 = vld [vmem:[%s0 + $0xc] sm:$0xf]
  %v29 = vld [vmem:[%s0 + $0x10] sm:$0xf]
  %v30 = vld [vmem:[%s0 + $0x14] sm:$0xf]
  %v31 = vld [vmem:[%s0 + $0x18] sm:$0xf]
  %v32 = vld [vmem:[%s0 + $0x1c] sm:$0xf]
  %v33 = vld [vmem:[%s0 + $0x20] sm:$0xf]
  %v34 = vld [vmem:[%s0 + $0x24] sm:$0xf]
  %v35 = vld [vmem:[%s0 + $0x28] sm:$0xf]
  %v36 = vld [vmem:[%s0 + $0x2c] sm:$0xf]
  %v37 = vld [vmem:[%s0 + $0x30] sm:$0xf]
  %v38 = vld [vmem:[%s0 + $0x34] sm:$0xf]
  %v39 = vld [vmem:[%s0 + $0x38] sm:$0xf]
  %v40 = vld [vmem:[%s0 + $0x3c] sm:$0xf]
  %v41 = vld [vmem:[%s1] sm:$0xf]
  %v42 = vld [vmem:[%s1 + $0x4] sm:$0xf]
  %v43 = vld [vmem:[%s1 + $0x8] sm:$0xf]
  %v44 = vld [vmem:[%s1 + $0xc] sm:$0xf]
  %v45 = vld [vmem:[%s1 + $0x10] sm:$0x3]
  %v62 = vunpack.c.l.b16 %v25
  %v63 = vunpack.c.l.b16 %v26
  %v64 = vunpack.c.l.b16 %v27
  %v65 = vunpack.c.l.b16 %v28
  %v66 = vunpack.c.l.b16 %v29
  %v67 = vunpack.c.l.b16 %v30
  %v68 = vunpack.c.l.b16 %v31
  %v69 = vunpack.c.l.b16 %v32
  %v70 = vunpack.c.l.b16 %v33
  %v71 = vunpack.c.l.b16 %v34
  %v72 = vunpack.c.l.b16 %v35
  %v73 = vunpack.c.l.b16 %v36
  %v74 = vunpack.c.l.b16 %v37
  %v75 = vunpack.c.l.b16 %v38
  %v76 = vunpack.c.l.b16 %v39
  %v77 = vunpack.c.l.b16 %v40
  %v78 = vpack.c.b16 %v63, %v62
  %v79 = vpack.c.b16 %v65, %v64
  %v80 = vpack.c.b16 %v67, %v66
  %v81 = vpack.c.b16 %v69, %v68
  %v82 = vpack.c.b16 %v71, %v70
  %v83 = vpack.c.b16 %v73, %v72
  %v84 = vpack.c.b16 %v75, %v74
  %v85 = vpack.c.b16 %v77, %v76
  %v91 = vunpack.c.l.b16 %v41
  %v92 = vunpack.c.l.b16 %v42
  %v93 = vunpack.c.l.b16 %v43
  %v94 = vunpack.c.l.b16 %v44
  %v95 = vunpack.c.l.b16 %v45
  %v96 = vpack.c.b16 %v92, %v91
  %v97 = vpack.c.b16 %v94, %v93
  %v98 = vpack.c.b16 %v95, %v95
  %vm101 = vcmask 293888
  %v103 = vsel %vm101, %v78, 0
  %v106 = vsel %vm101, %v79, 0
  %v109 = vsel %vm101, %v80, 0
  %v112 = vsel %vm101, %v81, 0
  %v115 = vsel %vm101, %v82, 0
  %v118 = vsel %vm101, %v83, 0
  %v121 = vsel %vm101, %v84, 0
  %v124 = vsel %vm101, %v85, 0
  %vm126 = vcmask 1041408
  %v128 = vsel %vm126, %v98, 0
  %130 = vmatpush.bf16.msra.mxu0 0
  %131 = vmatpush.bf16.msra.mxu0 0
  %132 = vmatpush.bf16.msra.mxu0 0
  %133 = vmatpush.bf16.msra.mxu0 0
  %134 = vmatpush.bf16.msra.mxu0 0
  %135 = vmatpush.bf16.msra.mxu0 %v128
  %136 = vmatpush.bf16.msra.mxu0 %v97
  %137 = vmatpush.bf16.msra.mxu0 %v96
  %138 = vmatmul.bf16.gmra.mxu0 %v103
  %v139 = vpop.f32.mrf.mxu0
  %v140 = vadd.f32 0.0, %v139
  %v141 = vpop.f32.mrf.mxu0
  %v142 = vadd.f32 0.0, %v141
  %143 = vmatmul.bf16.gmra.mxu0 %v106
  %v144 = vpop.f32.mrf.mxu0
  %v145 = vadd.f32 0.0, %v144
  %v146 = vpop.f32.mrf.mxu0
  %v147 = vadd.f32 0.0, %v146
  %148 = vmatmul.bf16.gmra.mxu0 %v109
  %v149 = vpop.f32.mrf.mxu0
  %v150 = vadd.f32 0.0, %v149
  %v151 = vpop.f32.mrf.mxu0
  %v152 = vadd.f32 0.0, %v151
  %153 = vmatmul.bf16.gmra.mxu0 %v112
  %v154 = vpop.f32.mrf.mxu0
  %v155 = vadd.f32 0.0, %v154
  %v156 = vpop.f32.mrf.mxu0
  %v157 = vadd.f32 0.0, %v156
  %158 = vmatmul.bf16.gmra.mxu0 %v115
  %v159 = vpop.f32.mrf.mxu0
  %v160 = vadd.f32 0.0, %v159
  %v161 = vpop.f32.mrf.mxu0
  %v162 = vadd.f32 0.0, %v161
  %163 = vmatmul.bf16.gmra.mxu0 %v118
  %v164 = vpop.f32.mrf.mxu0
  %v165 = vadd.f32 0.0, %v164
  %v166 = vpop.f32.mrf.mxu0
  %v167 = vadd.f32 0.0, %v166
  %168 = vmatmul.bf16.gmra.mxu0 %v121
  %v169 = vpop.f32.mrf.mxu0
  %v170 = vadd.f32 0.0, %v169
  %v171 = vpop.f32.mrf.mxu0
  %v172 = vadd.f32 0.0, %v171
  %173 = vmatmul.bf16.gmra.mxu0 %v124
  %v174 = vpop.f32.mrf.mxu0
  %v175 = vadd.f32 0.0, %v174
  %v176 = vpop.f32.mrf.mxu0
  %v177 = vadd.f32 0.0, %v176
  %178 = vdwg.mxu0
  %v179 = vmax.f32 %v140, 0.0
  %v180 = vmax.f32 %v142, 0.0
  %v181 = vmax.f32 %v145, 0.0
  %v182 = vmax.f32 %v147, 0.0
  %v183 = vmax.f32 %v150, 0.0
  %v184 = vmax.f32 %v152, 0.0
  %v185 = vmax.f32 %v155, 0.0
  %v186 = vmax.f32 %v157, 0.0
  %v187 = vmax.f32 %v160, 0.0
  %v188 = vmax.f32 %v162, 0.0
  %v189 = vmax.f32 %v165, 0.0
  %v190 = vmax.f32 %v167, 0.0
  %v191 = vmax.f32 %v170, 0.0
  %v192 = vmax.f32 %v172, 0.0
  %v193 = vmax.f32 %v175, 0.0
  %v194 = vmax.f32 %v177, 0.0
  %195 = vst [vmem:[#allocation2 + $0x10] sm:$0xff] %v179
  %196 = vst [vmem:[#allocation2 + $0x18] sm:$0xff] %v180
  %197 = vst [vmem:[#allocation2 + $0x20] sm:$0xff] %v181
  %198 = vst [vmem:[#allocation2 + $0x28] sm:$0xff] %v182
  %199 = vst [vmem:[#allocation2 + $0x30] sm:$0xff] %v183
  %200 = vst [vmem:[#allocation2 + $0x38] sm:$0xff] %v184
  %201 = vst [vmem:[#allocation2 + $0x40] sm:$0xff] %v185
  %202 = vst [vmem:[#allocation2 + $0x48] sm:$0xff] %v186
  %203 = vst [vmem:[#allocation2 + $0x50] sm:$0xff] %v187
  %204 = vst [vmem:[#allocation2 + $0x58] sm:$0xff] %v188
  %205 = vst [vmem:[#allocation2 + $0x60] sm:$0xff] %v189
  %206 = vst [vmem:[#allocation2 + $0x68] sm:$0xff] %v190
  %207 = vst [vmem:[#allocation2 + $0x70] sm:$0xff] %v191
  %208 = vst [vmem:[#allocation2 + $0x78] sm:$0xff] %v192
  %209 = vst [vmem:[#allocation2 + $0x80] sm:$0xff] %v193
  %210 = vst [vmem:[#allocation2 + $0x88] sm:$0xff] %v194
  %v211 = vld [vmem:[#allocation2 + $0x7] sm:$0xff]
  %v212 = vld [vmem:[#allocation2 + $0xf] sm:$0xff]
  %v213 = vld [vmem:[#allocation2 + $0x17] sm:$0xff]
  %v214 = vld [vmem:[#allocation2 + $0x1f] sm:$0xff]
  %v215 = vld [vmem:[#allocation2 + $0x27] sm:$0xff]
  %v216 = vld [vmem:[#allocation2 + $0x2f] sm:$0xff]
  %v217 = vld [vmem:[#allocation2 + $0x37] sm:$0xff]
  %v218 = vld [vmem:[#allocation2 + $0x3f] sm:$0xff]
  %v219 = vld [vmem:[#allocation2 + $0x47] sm:$0xff]
  %v220 = vld [vmem:[#allocation2 + $0x4f] sm:$0xff]
  %v221 = vld [vmem:[#allocation2 + $0x57] sm:$0xff]
  %v222 = vld [vmem:[#allocation2 + $0x5f] sm:$0xff]
  %v223 = vld [vmem:[#allocation2 + $0x67] sm:$0xff]
  %v224 = vld [vmem:[#allocation2 + $0x6f] sm:$0xff]
  %v225 = vld [vmem:[#allocation2 + $0x77] sm:$0xff]
  %v226 = vld [vmem:[#allocation2 + $0x7f] sm:$0xff]
  %v227 = vld [vmem:[%s4] sm:$0xf]
  %v228 = vld [vmem:[%s4 + $0x4] sm:$0xf]
  %v229 = vld [vmem:[%s4 + $0x8] sm:$0xf]
  %v230 = vld [vmem:[%s4 + $0xc] sm:$0xf]
  %v231 = vld [vmem:[%s4 + $0x10] sm:$0xf]
  %v232 = vld [vmem:[%s4 + $0x14] sm:$0xf]
  %v233 = vld [vmem:[%s4 + $0x18] sm:$0xf]
  %v234 = vld [vmem:[%s4 + $0x1c] sm:$0xf]
  %v235 = vld [vmem:[%s4 + $0x20] sm:$0xf]
  %v236 = vld [vmem:[%s4 + $0x24] sm:$0xf]
  %v237 = vld [vmem:[%s4 + $0x28] sm:$0xf]
  %v238 = vld [vmem:[%s4 + $0x2c] sm:$0xf]
  %v239 = vld [vmem:[%s4 + $0x30] sm:$0xf]
  %v240 = vld [vmem:[%s4 + $0x34] sm:$0xf]
  %v241 = vld [vmem:[%s4 + $0x38] sm:$0xf]
  %v242 = vld [vmem:[%s4 + $0x3c] sm:$0xf]
  %v243 = vunpack.c.l.bf16 %v227
  %v244 = vunpack.c.l.bf16 %v228
  %v245 = vunpack.c.l.bf16 %v229
  %v246 = vunpack.c.l.bf16 %v230
  %v247 = vunpack.c.l.bf16 %v231
  %v248 = vunpack.c.l.bf16 %v232
  %v249 = vunpack.c.l.bf16 %v233
  %v250 = vunpack.c.l.bf16 %v234
  %v251 = vunpack.c.l.bf16 %v235
  %v252 = vunpack.c.l.bf16 %v236
  %v253 = vunpack.c.l.bf16 %v237
  %v254 = vunpack.c.l.bf16 %v238
  %v255 = vunpack.c.l.bf16 %v239
  %v256 = vunpack.c.l.bf16 %v240
  %v257 = vunpack.c.l.bf16 %v241
  %v258 = vunpack.c.l.bf16 %v242
  %260 = vset.pattern.permute.xlu0 0
  %261 = vperm.xlu0 %260, %v243
  %v262 = vpop.permute.xlu0 %261
  %265 = vset.pattern.permute.xlu0 0
  %266 = vperm.xlu0 %265, %v244
  %v267 = vpop.permute.xlu0 %266
  %270 = vset.pattern.permute.xlu0 0
  %271 = vperm.xlu0 %270, %v245
  %v272 = vpop.permute.xlu0 %271
  %275 = vset.pattern.permute.xlu0 0
  %276 = vperm.xlu0 %275, %v246
  %v277 = vpop.permute.xlu0 %276
  %280 = vset.pattern.permute.xlu0 0
  %281 = vperm.xlu0 %280, %v247
  %v282 = vpop.permute.xlu0 %281
  %285 = vset.pattern.permute.xlu0 0
  %286 = vperm.xlu0 %285, %v248
  %v287 = vpop.permute.xlu0 %286
  %290 = vset.pattern.permute.xlu0 0
  %291 = vperm.xlu0 %290, %v249
  %v292 = vpop.permute.xlu0 %291
  %295 = vset.pattern.permute.xlu0 0
  %296 = vperm.xlu0 %295, %v250
  %v297 = vpop.permute.xlu0 %296
  %300 = vset.pattern.permute.xlu0 0
  %301 = vperm.xlu0 %300, %v251
  %v302 = vpop.permute.xlu0 %301
  %305 = vset.pattern.permute.xlu0 0
  %306 = vperm.xlu0 %305, %v252
  %v307 = vpop.permute.xlu0 %306
  %310 = vset.pattern.permute.xlu0 0
  %311 = vperm.xlu0 %310, %v253
  %v312 = vpop.permute.xlu0 %311
  %315 = vset.pattern.permute.xlu0 0
  %316 = vperm.xlu0 %315, %v254
  %v317 = vpop.permute.xlu0 %316
  %320 = vset.pattern.permute.xlu0 0
  %321 = vperm.xlu0 %320, %v255
  %v322 = vpop.permute.xlu0 %321
  %325 = vset.pattern.permute.xlu0 0
  %326 = vperm.xlu0 %325, %v256
  %v327 = vpop.permute.xlu0 %326
  %330 = vset.pattern.permute.xlu0 0
  %331 = vperm.xlu0 %330, %v257
  %v332 = vpop.permute.xlu0 %331
  %335 = vset.pattern.permute.xlu0 0
  %336 = vperm.xlu0 %335, %v258
  %v337 = vpop.permute.xlu0 %336
  %v339 = vmul.f32 %v211, %v262
  %v340 = vmul.f32 %v212, %v267
  %v341 = vmul.f32 %v213, %v272
  %v342 = vmul.f32 %v214, %v277
  %v343 = vmul.f32 %v215, %v282
  %v344 = vmul.f32 %v216, %v287
  %v345 = vmul.f32 %v217, %v292
  %v346 = vmul.f32 %v218, %v297
  %v347 = vmul.f32 %v219, %v302
  %v348 = vmul.f32 %v220, %v307
  %v349 = vmul.f32 %v221, %v312
  %v350 = vmul.f32 %v222, %v317
  %v351 = vmul.f32 %v223, %v322
  %v352 = vmul.f32 %v224, %v327
  %v353 = vmul.f32 %v225, %v332
  %v354 = vmul.f32 %v226, %v337
  %v355 = vpack.c.bf16 %v340, %v339
  %v356 = vpack.c.bf16 %v342, %v341
  %v357 = vpack.c.bf16 %v344, %v343
  %v358 = vpack.c.bf16 %v346, %v345
  %v359 = vpack.c.bf16 %v348, %v347
  %v360 = vpack.c.bf16 %v350, %v349
  %v361 = vpack.c.bf16 %v352, %v351
  %v362 = vpack.c.bf16 %v354, %v353
  %v363 = vld [vmem:[%s2] sm:$0xf]
  %v364 = vld [vmem:[%s2 + $0x4] sm:$0xf]
  %v365 = vld [vmem:[%s2 + $0x8] sm:$0xf]
  %v366 = vld [vmem:[%s2 + $0xc] sm:$0xf]
  %v367 = vld [vmem:[%s2 + $0x10] sm:$0xf]
  %v368 = vld [vmem:[%s2 + $0x14] sm:$0xf]
  %v369 = vld [vmem:[%s2 + $0x18] sm:$0xf]
  %v370 = vld [vmem:[%s2 + $0x1c] sm:$0xf]
  %v371 = vld [vmem:[%s2 + $0x20] sm:$0xf]
  %v372 = vld [vmem:[%s2 + $0x24] sm:$0xf]
  %v373 = vld [vmem:[%s2 + $0x28] sm:$0xf]
  %v374 = vld [vmem:[%s2 + $0x2c] sm:$0xf]
  %v375 = vld [vmem:[%s2 + $0x30] sm:$0xf]
  %v376 = vld [vmem:[%s2 + $0x34] sm:$0xf]
  %v377 = vld [vmem:[%s2 + $0x38] sm:$0xf]
  %v378 = vld [vmem:[%s2 + $0x3c] sm:$0xf]
  %v379 = vld [vmem:[#allocation2 + $0x8] sm:$0xff]
  %v380 = vld [vmem:[#allocation2 + $0x10] sm:$0xff]
  %v381 = vld [vmem:[#allocation2 + $0x18] sm:$0xff]
  %v382 = vld [vmem:[#allocation2 + $0x20] sm:$0xff]
  %v383 = vld [vmem:[#allocation2 + $0x28] sm:$0xff]
  %v384 = vld [vmem:[#allocation2 + $0x30] sm:$0xff]
  %v385 = vld [vmem:[#allocation2 + $0x38] sm:$0xff]
  %v386 = vld [vmem:[#allocation2 + $0x40] sm:$0xff]
  %v387 = vld [vmem:[#allocation2 + $0x48] sm:$0xff]
  %v388 = vld [vmem:[#allocation2 + $0x50] sm:$0xff]
  %v389 = vld [vmem:[#allocation2 + $0x58] sm:$0xff]
  %v390 = vld [vmem:[#allocation2 + $0x60] sm:$0xff]
  %v391 = vld [vmem:[#allocation2 + $0x68] sm:$0xff]
  %v392 = vld [vmem:[#allocation2 + $0x70] sm:$0xff]
  %v393 = vld [vmem:[#allocation2 + $0x78] sm:$0xff]
  %v394 = vld [vmem:[#allocation2 + $0x80] sm:$0xff]
  %395 = vset.pattern.permute.xlu0 1
  %396 = vperm.xlu0 %395, %v243
  %v397 = vpop.permute.xlu0 %396
  %399 = vset.pattern.permute.xlu0 1
  %400 = vperm.xlu0 %399, %v244
  %v401 = vpop.permute.xlu0 %400
  %403 = vset.pattern.permute.xlu0 1
  %404 = vperm.xlu0 %403, %v245
  %v405 = vpop.permute.xlu0 %404
  %407 = vset.pattern.permute.xlu0 1
  %408 = vperm.xlu0 %407, %v246
  %v409 = vpop.permute.xlu0 %408
  %411 = vset.pattern.permute.xlu0 1
  %412 = vperm.xlu0 %411, %v247
  %v413 = vpop.permute.xlu0 %412
  %415 = vset.pattern.permute.xlu0 1
  %416 = vperm.xlu0 %415, %v248
  %v417 = vpop.permute.xlu0 %416
  %419 = vset.pattern.permute.xlu0 1
  %420 = vperm.xlu0 %419, %v249
  %v421 = vpop.permute.xlu0 %420
  %423 = vset.pattern.permute.xlu0 1
  %424 = vperm.xlu0 %423, %v250
  %v425 = vpop.permute.xlu0 %424
  %427 = vset.pattern.permute.xlu0 1
  %428 = vperm.xlu0 %427, %v251
  %v429 = vpop.permute.xlu0 %428
  %431 = vset.pattern.permute.xlu0 1
  %432 = vperm.xlu0 %431, %v252
  %v433 = vpop.permute.xlu0 %432
  %435 = vset.pattern.permute.xlu0 1
  %436 = vperm.xlu0 %435, %v253
  %v437 = vpop.permute.xlu0 %436
  %439 = vset.pattern.permute.xlu0 1
  %440 = vperm.xlu0 %439, %v254
  %v441 = vpop.permute.xlu0 %440
  %443 = vset.pattern.permute.xlu0 1
  %444 = vperm.xlu0 %443, %v255
  %v445 = vpop.permute.xlu0 %444
  %447 = vset.pattern.permute.xlu0 1
  %448 = vperm.xlu0 %447, %v256
  %v449 = vpop.permute.xlu0 %448
  %451 = vset.pattern.permute.xlu0 1
  %452 = vperm.xlu0 %451, %v257
  %v453 = vpop.permute.xlu0 %452
  %455 = vset.pattern.permute.xlu0 1
  %456 = vperm.xlu0 %455, %v258
  %v457 = vpop.permute.xlu0 %456
  %v459 = vmul.f32 %v379, %v397
  %v460 = vmul.f32 %v380, %v401
  %v461 = vmul.f32 %v381, %v405
  %v462 = vmul.f32 %v382, %v409
  %v463 = vmul.f32 %v383, %v413
  %v464 = vmul.f32 %v384, %v417
  %v465 = vmul.f32 %v385, %v421
  %v466 = vmul.f32 %v386, %v425
  %v467 = vmul.f32 %v387, %v429
  %v468 = vmul.f32 %v388, %v433
  %v469 = vmul.f32 %v389, %v437
  %v470 = vmul.f32 %v390, %v441
  %v471 = vmul.f32 %v391, %v445
  %v472 = vmul.f32 %v392, %v449
  %v473 = vmul.f32 %v393, %v453
  %v474 = vmul.f32 %v394, %v457
  %v475 = vpack.c.bf16 %v460, %v459
  %v476 = vpack.c.bf16 %v462, %v461
  %v477 = vpack.c.bf16 %v464, %v463
  %v478 = vpack.c.bf16 %v466, %v465
  %v479 = vpack.c.bf16 %v468, %v467
  %v480 = vpack.c.bf16 %v470, %v469
  %v481 = vpack.c.bf16 %v472, %v471
  %v482 = vpack.c.bf16 %v474, %v473
  %s483 = scalar_lea.vmem %s2, 64
  %v484 = vld [vmem:[%s483] sm:$0xf]
  %v485 = vld [vmem:[%s483 + $0x4] sm:$0xf]
  %v486 = vld [vmem:[%s483 + $0x8] sm:$0xf]
  %v487 = vld [vmem:[%s483 + $0xc] sm:$0xf]
  %v488 = vld [vmem:[%s483 + $0x10] sm:$0xf]
  %v489 = vld [vmem:[%s483 + $0x14] sm:$0xf]
  %v490 = vld [vmem:[%s483 + $0x18] sm:$0xf]
  %v491 = vld [vmem:[%s483 + $0x1c] sm:$0xf]
  %v492 = vld [vmem:[%s483 + $0x20] sm:$0xf]
  %v493 = vld [vmem:[%s483 + $0x24] sm:$0xf]
  %v494 = vld [vmem:[%s483 + $0x28] sm:$0xf]
  %v495 = vld [vmem:[%s483 + $0x2c] sm:$0xf]
  %v496 = vld [vmem:[%s483 + $0x30] sm:$0xf]
  %v497 = vld [vmem:[%s483 + $0x34] sm:$0xf]
  %v498 = vld [vmem:[%s483 + $0x38] sm:$0xf]
  %v499 = vld [vmem:[%s483 + $0x3c] sm:$0xf]
  %v516 = vunpack.c.l.b16 %v484
  %v517 = vunpack.c.l.b16 %v485
  %v518 = vunpack.c.l.b16 %v486
  %v519 = vunpack.c.l.b16 %v487
  %v520 = vunpack.c.l.b16 %v488
  %v521 = vunpack.c.l.b16 %v489
  %v522 = vunpack.c.l.b16 %v490
  %v523 = vunpack.c.l.b16 %v491
  %v524 = vunpack.c.l.b16 %v492
  %v525 = vunpack.c.l.b16 %v493
  %v526 = vunpack.c.l.b16 %v494
  %v527 = vunpack.c.l.b16 %v495
  %v528 = vunpack.c.l.b16 %v496
  %v529 = vunpack.c.l.b16 %v497
  %v530 = vunpack.c.l.b16 %v498
  %v531 = vunpack.c.l.b16 %v499
  %v532 = vpack.c.b16 %v517, %v516
  %v533 = vpack.c.b16 %v519, %v518
  %v534 = vpack.c.b16 %v521, %v520
  %v535 = vpack.c.b16 %v523, %v522
  %v536 = vpack.c.b16 %v525, %v524
  %v537 = vpack.c.b16 %v527, %v526
  %v538 = vpack.c.b16 %v529, %v528
  %v539 = vpack.c.b16 %v531, %v530
  %548 = vmatpush.bf16.msra.mxu0 %v539
  %549 = vmatpush.bf16.msra.mxu0 %v538
  %550 = vmatpush.bf16.msra.mxu0 %v537
  %551 = vmatpush.bf16.msra.mxu0 %v536
  %552 = vmatpush.bf16.msra.mxu0 %v535
  %553 = vmatpush.bf16.msra.mxu0 %v534
  %554 = vmatpush.bf16.msra.mxu0 %v533
  %555 = vmatpush.bf16.msra.mxu0 %v532
  %556 = vmatmul.bf16.gmra.mxu0 %v475
  %v557 = vpop.f32.mrf.mxu0
  %v558 = vadd.f32 0.0, %v557
  %v559 = vpop.f32.mrf.mxu0
  %v560 = vadd.f32 0.0, %v559
  %561 = vmatmul.bf16.gmra.mxu0 %v476
  %v562 = vpop.f32.mrf.mxu0
  %v563 = vadd.f32 0.0, %v562
  %v564 = vpop.f32.mrf.mxu0
  %v565 = vadd.f32 0.0, %v564
  %566 = vmatmul.bf16.gmra.mxu0 %v477
  %v567 = vpop.f32.mrf.mxu0
  %v568 = vadd.f32 0.0, %v567
  %v569 = vpop.f32.mrf.mxu0
  %v570 = vadd.f32 0.0, %v569
  %571 = vmatmul.bf16.gmra.mxu0 %v478
  %v572 = vpop.f32.mrf.mxu0
  %v573 = vadd.f32 0.0, %v572
  %v574 = vpop.f32.mrf.mxu0
  %v575 = vadd.f32 0.0, %v574
  %576 = vmatmul.bf16.gmra.mxu0 %v479
  %v577 = vpop.f32.mrf.mxu0
  %v578 = vadd.f32 0.0, %v577
  %v579 = vpop.f32.mrf.mxu0
  %v580 = vadd.f32 0.0, %v579
  %581 = vmatmul.bf16.gmra.mxu0 %v480
  %v582 = vpop.f32.mrf.mxu0
  %v583 = vadd.f32 0.0, %v582
  %v584 = vpop.f32.mrf.mxu0
  %v585 = vadd.f32 0.0, %v584
  %586 = vmatmul.bf16.gmra.mxu0 %v481
  %v587 = vpop.f32.mrf.mxu0
  %v588 = vadd.f32 0.0, %v587
  %v589 = vpop.f32.mrf.mxu0
  %v590 = vadd.f32 0.0, %v589
  %591 = vmatmul.bf16.gmra.mxu0 %v482
  %v592 = vpop.f32.mrf.mxu0
  %v593 = vadd.f32 0.0, %v592
  %v594 = vpop.f32.mrf.mxu0
  %v595 = vadd.f32 0.0, %v594
  %596 = vdwg.mxu0
  %v613 = vunpack.c.l.b16 %v363
  %v614 = vunpack.c.l.b16 %v364
  %v615 = vunpack.c.l.b16 %v365
  %v616 = vunpack.c.l.b16 %v366
  %v617 = vunpack.c.l.b16 %v367
  %v618 = vunpack.c.l.b16 %v368
  %v619 = vunpack.c.l.b16 %v369
  %v620 = vunpack.c.l.b16 %v370
  %v621 = vunpack.c.l.b16 %v371
  %v622 = vunpack.c.l.b16 %v372
  %v623 = vunpack.c.l.b16 %v373
  %v624 = vunpack.c.l.b16 %v374
  %v625 = vunpack.c.l.b16 %v375
  %v626 = vunpack.c.l.b16 %v376
  %v627 = vunpack.c.l.b16 %v377
  %v628 = vunpack.c.l.b16 %v378
  %v629 = vpack.c.b16 %v614, %v613
  %v630 = vpack.c.b16 %v616, %v615
  %v631 = vpack.c.b16 %v618, %v617
  %v632 = vpack.c.b16 %v620, %v619
  %v633 = vpack.c.b16 %v622, %v621
  %v634 = vpack.c.b16 %v624, %v623
  %v635 = vpack.c.b16 %v626, %v625
  %v636 = vpack.c.b16 %v628, %v627
  %645 = vmatpush.bf16.msra.mxu0 %v636
  %646 = vmatpush.bf16.msra.mxu0 %v635
  %647 = vmatpush.bf16.msra.mxu0 %v634
  %648 = vmatpush.bf16.msra.mxu0 %v633
  %649 = vmatpush.bf16.msra.mxu0 %v632
  %650 = vmatpush.bf16.msra.mxu0 %v631
  %651 = vmatpush.bf16.msra.mxu0 %v630
  %652 = vmatpush.bf16.msra.mxu0 %v629
  %653 = vmatmul.bf16.gmra.mxu0 %v355
  %v654 = vpop.f32.mrf.mxu0
  %v655 = vadd.f32 %v558, %v654
  %v656 = vpop.f32.mrf.mxu0
  %v657 = vadd.f32 %v560, %v656
  %658 = vmatmul.bf16.gmra.mxu0 %v356
  %v659 = vpop.f32.mrf.mxu0
  %v660 = vadd.f32 %v563, %v659
  %v661 = vpop.f32.mrf.mxu0
  %v662 = vadd.f32 %v565, %v661
  %663 = vmatmul.bf16.gmra.mxu0 %v357
  %v664 = vpop.f32.mrf.mxu0
  %v665 = vadd.f32 %v568, %v664
  %v666 = vpop.f32.mrf.mxu0
  %v667 = vadd.f32 %v570, %v666
  %668 = vmatmul.bf16.gmra.mxu0 %v358
  %v669 = vpop.f32.mrf.mxu0
  %v670 = vadd.f32 %v573, %v669
  %v671 = vpop.f32.mrf.mxu0
  %v672 = vadd.f32 %v575, %v671
  %673 = vmatmul.bf16.gmra.mxu0 %v359
  %v674 = vpop.f32.mrf.mxu0
  %v675 = vadd.f32 %v578, %v674
  %v676 = vpop.f32.mrf.mxu0
  %v677 = vadd.f32 %v580, %v676
  %678 = vmatmul.bf16.gmra.mxu0 %v360
  %v679 = vpop.f32.mrf.mxu0
  %v680 = vadd.f32 %v583, %v679
  %v681 = vpop.f32.mrf.mxu0
  %v682 = vadd.f32 %v585, %v681
  %683 = vmatmul.bf16.gmra.mxu0 %v361
  %v684 = vpop.f32.mrf.mxu0
  %v685 = vadd.f32 %v588, %v684
  %v686 = vpop.f32.mrf.mxu0
  %v687 = vadd.f32 %v590, %v686
  %688 = vmatmul.bf16.gmra.mxu0 %v362
  %v689 = vpop.f32.mrf.mxu0
  %v690 = vadd.f32 %v593, %v689
  %v691 = vpop.f32.mrf.mxu0
  %v692 = vadd.f32 %v595, %v691
  %693 = vdwg.mxu0
  %v694 = vld [vmem:[#allocation2 + $0x9] sm:$0xff]
  %v695 = vld [vmem:[#allocation2 + $0x11] sm:$0xff]
  %v696 = vld [vmem:[#allocation2 + $0x19] sm:$0xff]
  %v697 = vld [vmem:[#allocation2 + $0x21] sm:$0xff]
  %v698 = vld [vmem:[#allocation2 + $0x29] sm:$0xff]
  %v699 = vld [vmem:[#allocation2 + $0x31] sm:$0xff]
  %v700 = vld [vmem:[#allocation2 + $0x39] sm:$0xff]
  %v701 = vld [vmem:[#allocation2 + $0x41] sm:$0xff]
  %v702 = vld [vmem:[#allocation2 + $0x49] sm:$0xff]
  %v703 = vld [vmem:[#allocation2 + $0x51] sm:$0xff]
  %v704 = vld [vmem:[#allocation2 + $0x59] sm:$0xff]
  %v705 = vld [vmem:[#allocation2 + $0x61] sm:$0xff]
  %v706 = vld [vmem:[#allocation2 + $0x69] sm:$0xff]
  %v707 = vld [vmem:[#allocation2 + $0x71] sm:$0xff]
  %v708 = vld [vmem:[#allocation2 + $0x79] sm:$0xff]
  %v709 = vld [vmem:[#allocation2 + $0x81] sm:$0xff]
  %710 = vset.pattern.permute.xlu0 2
  %711 = vperm.xlu0 %710, %v243
  %v712 = vpop.permute.xlu0 %711
  %714 = vset.pattern.permute.xlu0 2
  %715 = vperm.xlu0 %714, %v244
  %v716 = vpop.permute.xlu0 %715
  %718 = vset.pattern.permute.xlu0 2
  %719 = vperm.xlu0 %718, %v245
  %v720 = vpop.permute.xlu0 %719
  %722 = vset.pattern.permute.xlu0 2
  %723 = vperm.xlu0 %722, %v246
  %v724 = vpop.permute.xlu0 %723
  %726 = vset.pattern.permute.xlu0 2
  %727 = vperm.xlu0 %726, %v247
  %v728 = vpop.permute.xlu0 %727
  %730 = vset.pattern.permute.xlu0 2
  %731 = vperm.xlu0 %730, %v248
  %v732 = vpop.permute.xlu0 %731
  %734 = vset.pattern.permute.xlu0 2
  %735 = vperm.xlu0 %734, %v249
  %v736 = vpop.permute.xlu0 %735
  %738 = vset.pattern.permute.xlu0 2
  %739 = vperm.xlu0 %738, %v250
  %v740 = vpop.permute.xlu0 %739
  %742 = vset.pattern.permute.xlu0 2
  %743 = vperm.xlu0 %742, %v251
  %v744 = vpop.permute.xlu0 %743
  %746 = vset.pattern.permute.xlu0 2
  %747 = vperm.xlu0 %746, %v252
  %v748 = vpop.permute.xlu0 %747
  %750 = vset.pattern.permute.xlu0 2
  %751 = vperm.xlu0 %750, %v253
  %v752 = vpop.permute.xlu0 %751
  %754 = vset.pattern.permute.xlu0 2
  %755 = vperm.xlu0 %754, %v254
  %v756 = vpop.permute.xlu0 %755
  %758 = vset.pattern.permute.xlu0 2
  %759 = vperm.xlu0 %758, %v255
  %v760 = vpop.permute.xlu0 %759
  %762 = vset.pattern.permute.xlu0 2
  %763 = vperm.xlu0 %762, %v256
  %v764 = vpop.permute.xlu0 %763
  %766 = vset.pattern.permute.xlu0 2
  %767 = vperm.xlu0 %766, %v257
  %v768 = vpop.permute.xlu0 %767
  %770 = vset.pattern.permute.xlu0 2
  %771 = vperm.xlu0 %770, %v258
  %v772 = vpop.permute.xlu0 %771
  %v774 = vmul.f32 %v694, %v712
  %v775 = vmul.f32 %v695, %v716
  %v776 = vmul.f32 %v696, %v720
  %v777 = vmul.f32 %v697, %v724
  %v778 = vmul.f32 %v698, %v728
  %v779 = vmul.f32 %v699, %v732
  %v780 = vmul.f32 %v700, %v736
  %v781 = vmul.f32 %v701, %v740
  %v782 = vmul.f32 %v702, %v744
  %v783 = vmul.f32 %v703, %v748
  %v784 = vmul.f32 %v704, %v752
  %v785 = vmul.f32 %v705, %v756
  %v786 = vmul.f32 %v706, %v760
  %v787 = vmul.f32 %v707, %v764
  %v788 = vmul.f32 %v708, %v768
  %v789 = vmul.f32 %v709, %v772
  %v790 = vpack.c.bf16 %v775, %v774
  %v791 = vpack.c.bf16 %v777, %v776
  %v792 = vpack.c.bf16 %v779, %v778
  %v793 = vpack.c.bf16 %v781, %v780
  %v794 = vpack.c.bf16 %v783, %v782
  %v795 = vpack.c.bf16 %v785, %v784
  %v796 = vpack.c.bf16 %v787, %v786
  %v797 = vpack.c.bf16 %v789, %v788
  %s798 = scalar_lea.vmem %s2, 128
  %v799 = vld [vmem:[%s798] sm:$0xf]
  %v800 = vld [vmem:[%s798 + $0x4] sm:$0xf]
  %v801 = vld [vmem:[%s798 + $0x8] sm:$0xf]
  %v802 = vld [vmem:[%s798 + $0xc] sm:$0xf]
  %v803 = vld [vmem:[%s798 + $0x10] sm:$0xf]
  %v804 = vld [vmem:[%s798 + $0x14] sm:$0xf]
  %v805 = vld [vmem:[%s798 + $0x18] sm:$0xf]
  %v806 = vld [vmem:[%s798 + $0x1c] sm:$0xf]
  %v807 = vld [vmem:[%s798 + $0x20] sm:$0xf]
  %v808 = vld [vmem:[%s798 + $0x24] sm:$0xf]
  %v809 = vld [vmem:[%s798 + $0x28] sm:$0xf]
  %v810 = vld [vmem:[%s798 + $0x2c] sm:$0xf]
  %v811 = vld [vmem:[%s798 + $0x30] sm:$0xf]
  %v812 = vld [vmem:[%s798 + $0x34] sm:$0xf]
  %v813 = vld [vmem:[%s798 + $0x38] sm:$0xf]
  %v814 = vld [vmem:[%s798 + $0x3c] sm:$0xf]
  %v831 = vunpack.c.l.b16 %v799
  %v832 = vunpack.c.l.b16 %v800
  %v833 = vunpack.c.l.b16 %v801
  %v834 = vunpack.c.l.b16 %v802
  %v835 = vunpack.c.l.b16 %v803
  %v836 = vunpack.c.l.b16 %v804
  %v837 = vunpack.c.l.b16 %v805
  %v838 = vunpack.c.l.b16 %v806
  %v839 = vunpack.c.l.b16 %v807
  %v840 = vunpack.c.l.b16 %v808
  %v841 = vunpack.c.l.b16 %v809
  %v842 = vunpack.c.l.b16 %v810
  %v843 = vunpack.c.l.b16 %v811
  %v844 = vunpack.c.l.b16 %v812
  %v845 = vunpack.c.l.b16 %v813
  %v846 = vunpack.c.l.b16 %v814
  %v847 = vpack.c.b16 %v832, %v831
  %v848 = vpack.c.b16 %v834, %v833
  %v849 = vpack.c.b16 %v836, %v835
  %v850 = vpack.c.b16 %v838, %v837
  %v851 = vpack.c.b16 %v840, %v839
  %v852 = vpack.c.b16 %v842, %v841
  %v853 = vpack.c.b16 %v844, %v843
  %v854 = vpack.c.b16 %v846, %v845
  %863 = vmatpush.bf16.msra.mxu0 %v854
  %864 = vmatpush.bf16.msra.mxu0 %v853
  %865 = vmatpush.bf16.msra.mxu0 %v852
  %866 = vmatpush.bf16.msra.mxu0 %v851
  %867 = vmatpush.bf16.msra.mxu0 %v850
  %868 = vmatpush.bf16.msra.mxu0 %v849
  %869 = vmatpush.bf16.msra.mxu0 %v848
  %870 = vmatpush.bf16.msra.mxu0 %v847
  %871 = vmatmul.bf16.gmra.mxu0 %v790
  %v872 = vpop.f32.mrf.mxu0
  %v873 = vadd.f32 0.0, %v872
  %v874 = vpop.f32.mrf.mxu0
  %v875 = vadd.f32 0.0, %v874
  %876 = vmatmul.bf16.gmra.mxu0 %v791
  %v877 = vpop.f32.mrf.mxu0
  %v878 = vadd.f32 0.0, %v877
  %v879 = vpop.f32.mrf.mxu0
  %v880 = vadd.f32 0.0, %v879
  %881 = vmatmul.bf16.gmra.mxu0 %v792
  %v882 = vpop.f32.mrf.mxu0
  %v883 = vadd.f32 0.0, %v882
  %v884 = vpop.f32.mrf.mxu0
  %v885 = vadd.f32 0.0, %v884
  %886 = vmatmul.bf16.gmra.mxu0 %v793
  %v887 = vpop.f32.mrf.mxu0
  %v888 = vadd.f32 0.0, %v887
  %v889 = vpop.f32.mrf.mxu0
  %v890 = vadd.f32 0.0, %v889
  %891 = vmatmul.bf16.gmra.mxu0 %v794
  %v892 = vpop.f32.mrf.mxu0
  %v893 = vadd.f32 0.0, %v892
  %v894 = vpop.f32.mrf.mxu0
  %v895 = vadd.f32 0.0, %v894
  %896 = vmatmul.bf16.gmra.mxu0 %v795
  %v897 = vpop.f32.mrf.mxu0
  %v898 = vadd.f32 0.0, %v897
  %v899 = vpop.f32.mrf.mxu0
  %v900 = vadd.f32 0.0, %v899
  %901 = vmatmul.bf16.gmra.mxu0 %v796
  %v902 = vpop.f32.mrf.mxu0
  %v903 = vadd.f32 0.0, %v902
  %v904 = vpop.f32.mrf.mxu0
  %v905 = vadd.f32 0.0, %v904
  %906 = vmatmul.bf16.gmra.mxu0 %v797
  %v907 = vpop.f32.mrf.mxu0
  %v908 = vadd.f32 0.0, %v907
  %v909 = vpop.f32.mrf.mxu0
  %v910 = vadd.f32 0.0, %v909
  %911 = vdwg.mxu0
  %v912 = vadd.f32 %v655, %v873
  %v913 = vadd.f32 %v657, %v875
  %v914 = vadd.f32 %v660, %v878
  %v915 = vadd.f32 %v662, %v880
  %v916 = vadd.f32 %v665, %v883
  %v917 = vadd.f32 %v667, %v885
  %v918 = vadd.f32 %v670, %v888
  %v919 = vadd.f32 %v672, %v890
  %v920 = vadd.f32 %v675, %v893
  %v921 = vadd.f32 %v677, %v895
  %v922 = vadd.f32 %v680, %v898
  %v923 = vadd.f32 %v682, %v900
  %v924 = vadd.f32 %v685, %v903
  %v925 = vadd.f32 %v687, %v905
  %v926 = vadd.f32 %v690, %v908
  %v927 = vadd.f32 %v692, %v910
  %v928 = vld [vmem:[#allocation2 + $0xf] sm:$0xff]
  %v929 = vld [vmem:[#allocation2 + $0x17] sm:$0xff]
  %v930 = vld [vmem:[#allocation2 + $0x1f] sm:$0xff]
  %v931 = vld [vmem:[#allocation2 + $0x27] sm:$0xff]
  %v932 = vld [vmem:[#allocation2 + $0x2f] sm:$0xff]
  %v933 = vld [vmem:[#allocation2 + $0x37] sm:$0xff]
  %v934 = vld [vmem:[#allocation2 + $0x3f] sm:$0xff]
  %v935 = vld [vmem:[#allocation2 + $0x47] sm:$0xff]
  %v936 = vld [vmem:[#allocation2 + $0x4f] sm:$0xff]
  %v937 = vld [vmem:[#allocation2 + $0x57] sm:$0xff]
  %v938 = vld [vmem:[#allocation2 + $0x5f] sm:$0xff]
  %v939 = vld [vmem:[#allocation2 + $0x67] sm:$0xff]
  %v940 = vld [vmem:[#allocation2 + $0x6f] sm:$0xff]
  %v941 = vld [vmem:[#allocation2 + $0x77] sm:$0xff]
  %v942 = vld [vmem:[#allocation2 + $0x7f] sm:$0xff]
  %v943 = vld [vmem:[#allocation2 + $0x87] sm:$0xff]
  %944 = vset.pattern.permute.xlu0 3
  %945 = vperm.xlu0 %944, %v243
  %v946 = vpop.permute.xlu0 %945
  %948 = vset.pattern.permute.xlu0 3
  %949 = vperm.xlu0 %948, %v244
  %v950 = vpop.permute.xlu0 %949
  %952 = vset.pattern.permute.xlu0 3
  %953 = vperm.xlu0 %952, %v245
  %v954 = vpop.permute.xlu0 %953
  %956 = vset.pattern.permute.xlu0 3
  %957 = vperm.xlu0 %956, %v246
  %v958 = vpop.permute.xlu0 %957
  %960 = vset.pattern.permute.xlu0 3
  %961 = vperm.xlu0 %960, %v247
  %v962 = vpop.permute.xlu0 %961
  %964 = vset.pattern.permute.xlu0 3
  %965 = vperm.xlu0 %964, %v248
  %v966 = vpop.permute.xlu0 %965
  %968 = vset.pattern.permute.xlu0 3
  %969 = vperm.xlu0 %968, %v249
  %v970 = vpop.permute.xlu0 %969
  %972 = vset.pattern.permute.xlu0 3
  %973 = vperm.xlu0 %972, %v250
  %v974 = vpop.permute.xlu0 %973
  %976 = vset.pattern.permute.xlu0 3
  %977 = vperm.xlu0 %976, %v251
  %v978 = vpop.permute.xlu0 %977
  %980 = vset.pattern.permute.xlu0 3
  %981 = vperm.xlu0 %980, %v252
  %v982 = vpop.permute.xlu0 %981
  %984 = vset.pattern.permute.xlu0 3
  %985 = vperm.xlu0 %984, %v253
  %v986 = vpop.permute.xlu0 %985
  %988 = vset.pattern.permute.xlu0 3
  %989 = vperm.xlu0 %988, %v254
  %v990 = vpop.permute.xlu0 %989
  %992 = vset.pattern.permute.xlu0 3
  %993 = vperm.xlu0 %992, %v255
  %v994 = vpop.permute.xlu0 %993
  %996 = vset.pattern.permute.xlu0 3
  %997 = vperm.xlu0 %996, %v256
  %v998 = vpop.permute.xlu0 %997
  %1000 = vset.pattern.permute.xlu0 3
  %1001 = vperm.xlu0 %1000, %v257
  %v1002 = vpop.permute.xlu0 %1001
  %1004 = vset.pattern.permute.xlu0 3
  %1005 = vperm.xlu0 %1004, %v258
  %v1006 = vpop.permute.xlu0 %1005
  %v1008 = vmul.f32 %v928, %v946
  %v1009 = vmul.f32 %v929, %v950
  %v1010 = vmul.f32 %v930, %v954
  %v1011 = vmul.f32 %v931, %v958
  %v1012 = vmul.f32 %v932, %v962
  %v1013 = vmul.f32 %v933, %v966
  %v1014 = vmul.f32 %v934, %v970
  %v1015 = vmul.f32 %v935, %v974
  %v1016 = vmul.f32 %v936, %v978
  %v1017 = vmul.f32 %v937, %v982
  %v1018 = vmul.f32 %v938, %v986
  %v1019 = vmul.f32 %v939, %v990
  %v1020 = vmul.f32 %v940, %v994
  %v1021 = vmul.f32 %v941, %v998
  %v1022 = vmul.f32 %v942, %v1002
  %v1023 = vmul.f32 %v943, %v1006
  %v1024 = vpack.c.bf16 %v1009, %v1008
  %v1025 = vpack.c.bf16 %v1011, %v1010
  %v1026 = vpack.c.bf16 %v1013, %v1012
  %v1027 = vpack.c.bf16 %v1015, %v1014
  %v1028 = vpack.c.bf16 %v1017, %v1016
  %v1029 = vpack.c.bf16 %v1019, %v1018
  %v1030 = vpack.c.bf16 %v1021, %v1020
  %v1031 = vpack.c.bf16 %v1023, %v1022
  %s1032 = scalar_lea.vmem %s2, 192
  %v1033 = vld [vmem:[%s1032] sm:$0xf]
  %v1034 = vld [vmem:[%s1032 + $0x4] sm:$0xf]
  %v1035 = vld [vmem:[%s1032 + $0x8] sm:$0xf]
  %v1036 = vld [vmem:[%s1032 + $0xc] sm:$0xf]
  %v1037 = vld [vmem:[%s1032 + $0x10] sm:$0xf]
  %v1038 = vld [vmem:[%s1032 + $0x14] sm:$0xf]
  %v1039 = vld [vmem:[%s1032 + $0x18] sm:$0xf]
  %v1040 = vld [vmem:[%s1032 + $0x1c] sm:$0xf]
  %v1041 = vld [vmem:[%s1032 + $0x20] sm:$0xf]
  %v1042 = vld [vmem:[%s1032 + $0x24] sm:$0xf]
  %v1043 = vld [vmem:[%s1032 + $0x28] sm:$0xf]
  %v1044 = vld [vmem:[%s1032 + $0x2c] sm:$0xf]
  %v1045 = vld [vmem:[%s1032 + $0x30] sm:$0xf]
  %v1046 = vld [vmem:[%s1032 + $0x34] sm:$0xf]
  %v1047 = vld [vmem:[%s1032 + $0x38] sm:$0xf]
  %v1048 = vld [vmem:[%s1032 + $0x3c] sm:$0xf]
  %v1065 = vunpack.c.l.b16 %v1033
  %v1066 = vunpack.c.l.b16 %v1034
  %v1067 = vunpack.c.l.b16 %v1035
  %v1068 = vunpack.c.l.b16 %v1036
  %v1069 = vunpack.c.l.b16 %v1037
  %v1070 = vunpack.c.l.b16 %v1038
  %v1071 = vunpack.c.l.b16 %v1039
  %v1072 = vunpack.c.l.b16 %v1040
  %v1073 = vunpack.c.l.b16 %v1041
  %v1074 = vunpack.c.l.b16 %v1042
  %v1075 = vunpack.c.l.b16 %v1043
  %v1076 = vunpack.c.l.b16 %v1044
  %v1077 = vunpack.c.l.b16 %v1045
  %v1078 = vunpack.c.l.b16 %v1046
  %v1079 = vunpack.c.l.b16 %v1047
  %v1080 = vunpack.c.l.b16 %v1048
  %v1081 = vpack.c.b16 %v1066, %v1065
  %v1082 = vpack.c.b16 %v1068, %v1067
  %v1083 = vpack.c.b16 %v1070, %v1069
  %v1084 = vpack.c.b16 %v1072, %v1071
  %v1085 = vpack.c.b16 %v1074, %v1073
  %v1086 = vpack.c.b16 %v1076, %v1075
  %v1087 = vpack.c.b16 %v1078, %v1077
  %v1088 = vpack.c.b16 %v1080, %v1079
  %1097 = vmatpush.bf16.msra.mxu0 %v1088
  %1098 = vmatpush.bf16.msra.mxu0 %v1087
  %1099 = vmatpush.bf16.msra.mxu0 %v1086
  %1100 = vmatpush.bf16.msra.mxu0 %v1085
  %1101 = vmatpush.bf16.msra.mxu0 %v1084
  %1102 = vmatpush.bf16.msra.mxu0 %v1083
  %1103 = vmatpush.bf16.msra.mxu0 %v1082
  %1104 = vmatpush.bf16.msra.mxu0 %v1081
  %1105 = vmatmul.bf16.gmra.mxu0 %v1024
  %v1106 = vpop.f32.mrf.mxu0
  %v1107 = vadd.f32 0.0, %v1106
  %v1108 = vpop.f32.mrf.mxu0
  %v1109 = vadd.f32 0.0, %v1108
  %1110 = vmatmul.bf16.gmra.mxu0 %v1025
  %v1111 = vpop.f32.mrf.mxu0
  %v1112 = vadd.f32 0.0, %v1111
  %v1113 = vpop.f32.mrf.mxu0
  %v1114 = vadd.f32 0.0, %v1113
  %1115 = vmatmul.bf16.gmra.mxu0 %v1026
  %v1116 = vpop.f32.mrf.mxu0
  %v1117 = vadd.f32 0.0, %v1116
  %v1118 = vpop.f32.mrf.mxu0
  %v1119 = vadd.f32 0.0, %v1118
  %1120 = vmatmul.bf16.gmra.mxu0 %v1027
  %v1121 = vpop.f32.mrf.mxu0
  %v1122 = vadd.f32 0.0, %v1121
  %v1123 = vpop.f32.mrf.mxu0
  %v1124 = vadd.f32 0.0, %v1123
  %1125 = vmatmul.bf16.gmra.mxu0 %v1028
  %v1126 = vpop.f32.mrf.mxu0
  %v1127 = vadd.f32 0.0, %v1126
  %v1128 = vpop.f32.mrf.mxu0
  %v1129 = vadd.f32 0.0, %v1128
  %1130 = vmatmul.bf16.gmra.mxu0 %v1029
  %v1131 = vpop.f32.mrf.mxu0
  %v1132 = vadd.f32 0.0, %v1131
  %v1133 = vpop.f32.mrf.mxu0
  %v1134 = vadd.f32 0.0, %v1133
  %1135 = vmatmul.bf16.gmra.mxu0 %v1030
  %v1136 = vpop.f32.mrf.mxu0
  %v1137 = vadd.f32 0.0, %v1136
  %v1138 = vpop.f32.mrf.mxu0
  %v1139 = vadd.f32 0.0, %v1138
  %1140 = vmatmul.bf16.gmra.mxu0 %v1031
  %v1141 = vpop.f32.mrf.mxu0
  %v1142 = vadd.f32 0.0, %v1141
  %v1143 = vpop.f32.mrf.mxu0
  %v1144 = vadd.f32 0.0, %v1143
  %1145 = vdwg.mxu0
  %v1146 = vadd.f32 %v912, %v1107
  %v1147 = vadd.f32 %v913, %v1109
  %v1148 = vadd.f32 %v914, %v1112
  %v1149 = vadd.f32 %v915, %v1114
  %v1150 = vadd.f32 %v916, %v1117
  %v1151 = vadd.f32 %v917, %v1119
  %v1152 = vadd.f32 %v918, %v1122
  %v1153 = vadd.f32 %v919, %v1124
  %v1154 = vadd.f32 %v920, %v1127
  %v1155 = vadd.f32 %v921, %v1129
  %v1156 = vadd.f32 %v922, %v1132
  %v1157 = vadd.f32 %v923, %v1134
  %v1158 = vadd.f32 %v924, %v1137
  %v1159 = vadd.f32 %v925, %v1139
  %v1160 = vadd.f32 %v926, %v1142
  %v1161 = vadd.f32 %v927, %v1144
  %v1162 = vld [vmem:[#allocation2 + $0x10] sm:$0xff]
  %v1163 = vld [vmem:[#allocation2 + $0x18] sm:$0xff]
  %v1164 = vld [vmem:[#allocation2 + $0x20] sm:$0xff]
  %v1165 = vld [vmem:[#allocation2 + $0x28] sm:$0xff]
  %v1166 = vld [vmem:[#allocation2 + $0x30] sm:$0xff]
  %v1167 = vld [vmem:[#allocation2 + $0x38] sm:$0xff]
  %v1168 = vld [vmem:[#allocation2 + $0x40] sm:$0xff]
  %v1169 = vld [vmem:[#allocation2 + $0x48] sm:$0xff]
  %v1170 = vld [vmem:[#allocation2 + $0x50] sm:$0xff]
  %v1171 = vld [vmem:[#allocation2 + $0x58] sm:$0xff]
  %v1172 = vld [vmem:[#allocation2 + $0x60] sm:$0xff]
  %v1173 = vld [vmem:[#allocation2 + $0x68] sm:$0xff]
  %v1174 = vld [vmem:[#allocation2 + $0x70] sm:$0xff]
  %v1175 = vld [vmem:[#allocation2 + $0x78] sm:$0xff]
  %v1176 = vld [vmem:[#allocation2 + $0x80] sm:$0xff]
  %v1177 = vld [vmem:[#allocation2 + $0x88] sm:$0xff]
  %1178 = vset.pattern.permute.xlu0 4
  %1179 = vperm.xlu0 %1178, %v243
  %v1180 = vpop.permute.xlu0 %1179
  %1182 = vset.pattern.permute.xlu0 4
  %1183 = vperm.xlu0 %1182, %v244
  %v1184 = vpop.permute.xlu0 %1183
  %1186 = vset.pattern.permute.xlu0 4
  %1187 = vperm.xlu0 %1186, %v245
  %v1188 = vpop.permute.xlu0 %1187
  %1190 = vset.pattern.permute.xlu0 4
  %1191 = vperm.xlu0 %1190, %v246
  %v1192 = vpop.permute.xlu0 %1191
  %1194 = vset.pattern.permute.xlu0 4
  %1195 = vperm.xlu0 %1194, %v247
  %v1196 = vpop.permute.xlu0 %1195
  %1198 = vset.pattern.permute.xlu0 4
  %1199 = vperm.xlu0 %1198, %v248
  %v1200 = vpop.permute.xlu0 %1199
  %1202 = vset.pattern.permute.xlu0 4
  %1203 = vperm.xlu0 %1202, %v249
  %v1204 = vpop.permute.xlu0 %1203
  %1206 = vset.pattern.permute.xlu0 4
  %1207 = vperm.xlu0 %1206, %v250
  %v1208 = vpop.permute.xlu0 %1207
  %1210 = vset.pattern.permute.xlu0 4
  %1211 = vperm.xlu0 %1210, %v251
  %v1212 = vpop.permute.xlu0 %1211
  %1214 = vset.pattern.permute.xlu0 4
  %1215 = vperm.xlu0 %1214, %v252
  %v1216 = vpop.permute.xlu0 %1215
  %1218 = vset.pattern.permute.xlu0 4
  %1219 = vperm.xlu0 %1218, %v253
  %v1220 = vpop.permute.xlu0 %1219
  %1222 = vset.pattern.permute.xlu0 4
  %1223 = vperm.xlu0 %1222, %v254
  %v1224 = vpop.permute.xlu0 %1223
  %1226 = vset.pattern.permute.xlu0 4
  %1227 = vperm.xlu0 %1226, %v255
  %v1228 = vpop.permute.xlu0 %1227
  %1230 = vset.pattern.permute.xlu0 4
  %1231 = vperm.xlu0 %1230, %v256
  %v1232 = vpop.permute.xlu0 %1231
  %1234 = vset.pattern.permute.xlu0 4
  %1235 = vperm.xlu0 %1234, %v257
  %v1236 = vpop.permute.xlu0 %1235
  %1238 = vset.pattern.permute.xlu0 4
  %1239 = vperm.xlu0 %1238, %v258
  %v1240 = vpop.permute.xlu0 %1239
  %v1242 = vmul.f32 %v1162, %v1180
  %v1243 = vmul.f32 %v1163, %v1184
  %v1244 = vmul.f32 %v1164, %v1188
  %v1245 = vmul.f32 %v1165, %v1192
  %v1246 = vmul.f32 %v1166, %v1196
  %v1247 = vmul.f32 %v1167, %v1200
  %v1248 = vmul.f32 %v1168, %v1204
  %v1249 = vmul.f32 %v1169, %v1208
  %v1250 = vmul.f32 %v1170, %v1212
  %v1251 = vmul.f32 %v1171, %v1216
  %v1252 = vmul.f32 %v1172, %v1220
  %v1253 = vmul.f32 %v1173, %v1224
  %v1254 = vmul.f32 %v1174, %v1228
  %v1255 = vmul.f32 %v1175, %v1232
  %v1256 = vmul.f32 %v1176, %v1236
  %v1257 = vmul.f32 %v1177, %v1240
  %v1258 = vpack.c.bf16 %v1243, %v1242
  %v1259 = vpack.c.bf16 %v1245, %v1244
  %v1260 = vpack.c.bf16 %v1247, %v1246
  %v1261 = vpack.c.bf16 %v1249, %v1248
  %v1262 = vpack.c.bf16 %v1251, %v1250
  %v1263 = vpack.c.bf16 %v1253, %v1252
  %v1264 = vpack.c.bf16 %v1255, %v1254
  %v1265 = vpack.c.bf16 %v1257, %v1256
  %s1266 = scalar_lea.vmem %s2, 256
  %v1267 = vld [vmem:[%s1266] sm:$0xf]
  %v1268 = vld [vmem:[%s1266 + $0x4] sm:$0xf]
  %v1269 = vld [vmem:[%s1266 + $0x8] sm:$0xf]
  %v1270 = vld [vmem:[%s1266 + $0xc] sm:$0xf]
  %v1271 = vld [vmem:[%s1266 + $0x10] sm:$0xf]
  %v1272 = vld [vmem:[%s1266 + $0x14] sm:$0xf]
  %v1273 = vld [vmem:[%s1266 + $0x18] sm:$0xf]
  %v1274 = vld [vmem:[%s1266 + $0x1c] sm:$0xf]
  %v1275 = vld [vmem:[%s1266 + $0x20] sm:$0xf]
  %v1276 = vld [vmem:[%s1266 + $0x24] sm:$0xf]
  %v1277 = vld [vmem:[%s1266 + $0x28] sm:$0xf]
  %v1278 = vld [vmem:[%s1266 + $0x2c] sm:$0xf]
  %v1279 = vld [vmem:[%s1266 + $0x30] sm:$0xf]
  %v1280 = vld [vmem:[%s1266 + $0x34] sm:$0xf]
  %v1281 = vld [vmem:[%s1266 + $0x38] sm:$0xf]
  %v1282 = vld [vmem:[%s1266 + $0x3c] sm:$0xf]
  %v1299 = vunpack.c.l.b16 %v1267
  %v1300 = vunpack.c.l.b16 %v1268
  %v1301 = vunpack.c.l.b16 %v1269
  %v1302 = vunpack.c.l.b16 %v1270
  %v1303 = vunpack.c.l.b16 %v1271
  %v1304 = vunpack.c.l.b16 %v1272
  %v1305 = vunpack.c.l.b16 %v1273
  %v1306 = vunpack.c.l.b16 %v1274
  %v1307 = vunpack.c.l.b16 %v1275
  %v1308 = vunpack.c.l.b16 %v1276
  %v1309 = vunpack.c.l.b16 %v1277
  %v1310 = vunpack.c.l.b16 %v1278
  %v1311 = vunpack.c.l.b16 %v1279
  %v1312 = vunpack.c.l.b16 %v1280
  %v1313 = vunpack.c.l.b16 %v1281
  %v1314 = vunpack.c.l.b16 %v1282
  %v1315 = vpack.c.b16 %v1300, %v1299
  %v1316 = vpack.c.b16 %v1302, %v1301
  %v1317 = vpack.c.b16 %v1304, %v1303
  %v1318 = vpack.c.b16 %v1306, %v1305
  %v1319 = vpack.c.b16 %v1308, %v1307
  %v1320 = vpack.c.b16 %v1310, %v1309
  %v1321 = vpack.c.b16 %v1312, %v1311
  %v1322 = vpack.c.b16 %v1314, %v1313
  %1331 = vmatpush.bf16.msra.mxu0 %v1322
  %1332 = vmatpush.bf16.msra.mxu0 %v1321
  %1333 = vmatpush.bf16.msra.mxu0 %v1320
  %1334 = vmatpush.bf16.msra.mxu0 %v1319
  %1335 = vmatpush.bf16.msra.mxu0 %v1318
  %1336 = vmatpush.bf16.msra.mxu0 %v1317
  %1337 = vmatpush.bf16.msra.mxu0 %v1316
  %1338 = vmatpush.bf16.msra.mxu0 %v1315
  %1339 = vmatmul.bf16.gmra.mxu0 %v1258
  %v1340 = vpop.f32.mrf.mxu0
  %v1341 = vadd.f32 0.0, %v1340
  %v1342 = vpop.f32.mrf.mxu0
  %v1343 = vadd.f32 0.0, %v1342
  %1344 = vmatmul.bf16.gmra.mxu0 %v1259
  %v1345 = vpop.f32.mrf.mxu0
  %v1346 = vadd.f32 0.0, %v1345
  %v1347 = vpop.f32.mrf.mxu0
  %v1348 = vadd.f32 0.0, %v1347
  %1349 = vmatmul.bf16.gmra.mxu0 %v1260
  %v1350 = vpop.f32.mrf.mxu0
  %v1351 = vadd.f32 0.0, %v1350
  %v1352 = vpop.f32.mrf.mxu0
  %v1353 = vadd.f32 0.0, %v1352
  %1354 = vmatmul.bf16.gmra.mxu0 %v1261
  %v1355 = vpop.f32.mrf.mxu0
  %v1356 = vadd.f32 0.0, %v1355
  %v1357 = vpop.f32.mrf.mxu0
  %v1358 = vadd.f32 0.0, %v1357
  %1359 = vmatmul.bf16.gmra.mxu0 %v1262
  %v1360 = vpop.f32.mrf.mxu0
  %v1361 = vadd.f32 0.0, %v1360
  %v1362 = vpop.f32.mrf.mxu0
  %v1363 = vadd.f32 0.0, %v1362
  %1364 = vmatmul.bf16.gmra.mxu0 %v1263
  %v1365 = vpop.f32.mrf.mxu0
  %v1366 = vadd.f32 0.0, %v1365
  %v1367 = vpop.f32.mrf.mxu0
  %v1368 = vadd.f32 0.0, %v1367
  %1369 = vmatmul.bf16.gmra.mxu0 %v1264
  %v1370 = vpop.f32.mrf.mxu0
  %v1371 = vadd.f32 0.0, %v1370
  %v1372 = vpop.f32.mrf.mxu0
  %v1373 = vadd.f32 0.0, %v1372
  %1374 = vmatmul.bf16.gmra.mxu0 %v1265
  %v1375 = vpop.f32.mrf.mxu0
  %v1376 = vadd.f32 0.0, %v1375
  %v1377 = vpop.f32.mrf.mxu0
  %v1378 = vadd.f32 0.0, %v1377
  %1379 = vdwg.mxu0
  %v1380 = vadd.f32 %v1146, %v1341
  %v1381 = vadd.f32 %v1147, %v1343
  %v1382 = vadd.f32 %v1148, %v1346
  %v1383 = vadd.f32 %v1149, %v1348
  %v1384 = vadd.f32 %v1150, %v1351
  %v1385 = vadd.f32 %v1151, %v1353
  %v1386 = vadd.f32 %v1152, %v1356
  %v1387 = vadd.f32 %v1153, %v1358
  %v1388 = vadd.f32 %v1154, %v1361
  %v1389 = vadd.f32 %v1155, %v1363
  %v1390 = vadd.f32 %v1156, %v1366
  %v1391 = vadd.f32 %v1157, %v1368
  %v1392 = vadd.f32 %v1158, %v1371
  %v1393 = vadd.f32 %v1159, %v1373
  %v1394 = vadd.f32 %v1160, %v1376
  %v1395 = vadd.f32 %v1161, %v1378
  %v1396 = vld [vmem:[#allocation2 + $0x11] sm:$0xff]
  %v1397 = vld [vmem:[#allocation2 + $0x19] sm:$0xff]
  %v1398 = vld [vmem:[#allocation2 + $0x21] sm:$0xff]
  %v1399 = vld [vmem:[#allocation2 + $0x29] sm:$0xff]
  %v1400 = vld [vmem:[#allocation2 + $0x31] sm:$0xff]
  %v1401 = vld [vmem:[#allocation2 + $0x39] sm:$0xff]
  %v1402 = vld [vmem:[#allocation2 + $0x41] sm:$0xff]
  %v1403 = vld [vmem:[#allocation2 + $0x49] sm:$0xff]
  %v1404 = vld [vmem:[#allocation2 + $0x51] sm:$0xff]
  %v1405 = vld [vmem:[#allocation2 + $0x59] sm:$0xff]
  %v1406 = vld [vmem:[#allocation2 + $0x61] sm:$0xff]
  %v1407 = vld [vmem:[#allocation2 + $0x69] sm:$0xff]
  %v1408 = vld [vmem:[#allocation2 + $0x71] sm:$0xff]
  %v1409 = vld [vmem:[#allocation2 + $0x79] sm:$0xff]
  %v1410 = vld [vmem:[#allocation2 + $0x81] sm:$0xff]
  %v1411 = vld [vmem:[#allocation2 + $0x89] sm:$0xff]
  %1412 = vset.pattern.permute.xlu0 5
  %1413 = vperm.xlu0 %1412, %v243
  %v1414 = vpop.permute.xlu0 %1413
  %1416 = vset.pattern.permute.xlu0 5
  %1417 = vperm.xlu0 %1416, %v244
  %v1418 = vpop.permute.xlu0 %1417
  %1420 = vset.pattern.permute.xlu0 5
  %1421 = vperm.xlu0 %1420, %v245
  %v1422 = vpop.permute.xlu0 %1421
  %1424 = vset.pattern.permute.xlu0 5
  %1425 = vperm.xlu0 %1424, %v246
  %v1426 = vpop.permute.xlu0 %1425
  %1428 = vset.pattern.permute.xlu0 5
  %1429 = vperm.xlu0 %1428, %v247
  %v1430 = vpop.permute.xlu0 %1429
  %1432 = vset.pattern.permute.xlu0 5
  %1433 = vperm.xlu0 %1432, %v248
  %v1434 = vpop.permute.xlu0 %1433
  %1436 = vset.pattern.permute.xlu0 5
  %1437 = vperm.xlu0 %1436, %v249
  %v1438 = vpop.permute.xlu0 %1437
  %1440 = vset.pattern.permute.xlu0 5
  %1441 = vperm.xlu0 %1440, %v250
  %v1442 = vpop.permute.xlu0 %1441
  %1444 = vset.pattern.permute.xlu0 5
  %1445 = vperm.xlu0 %1444, %v251
  %v1446 = vpop.permute.xlu0 %1445
  %1448 = vset.pattern.permute.xlu0 5
  %1449 = vperm.xlu0 %1448, %v252
  %v1450 = vpop.permute.xlu0 %1449
  %1452 = vset.pattern.permute.xlu0 5
  %1453 = vperm.xlu0 %1452, %v253
  %v1454 = vpop.permute.xlu0 %1453
  %1456 = vset.pattern.permute.xlu0 5
  %1457 = vperm.xlu0 %1456, %v254
  %v1458 = vpop.permute.xlu0 %1457
  %1460 = vset.pattern.permute.xlu0 5
  %1461 = vperm.xlu0 %1460, %v255
  %v1462 = vpop.permute.xlu0 %1461
  %1464 = vset.pattern.permute.xlu0 5
  %1465 = vperm.xlu0 %1464, %v256
  %v1466 = vpop.permute.xlu0 %1465
  %1468 = vset.pattern.permute.xlu0 5
  %1469 = vperm.xlu0 %1468, %v257
  %v1470 = vpop.permute.xlu0 %1469
  %1472 = vset.pattern.permute.xlu0 5
  %1473 = vperm.xlu0 %1472, %v258
  %v1474 = vpop.permute.xlu0 %1473
  %v1476 = vmul.f32 %v1396, %v1414
  %v1477 = vmul.f32 %v1397, %v1418
  %v1478 = vmul.f32 %v1398, %v1422
  %v1479 = vmul.f32 %v1399, %v1426
  %v1480 = vmul.f32 %v1400, %v1430
  %v1481 = vmul.f32 %v1401, %v1434
  %v1482 = vmul.f32 %v1402, %v1438
  %v1483 = vmul.f32 %v1403, %v1442
  %v1484 = vmul.f32 %v1404, %v1446
  %v1485 = vmul.f32 %v1405, %v1450
  %v1486 = vmul.f32 %v1406, %v1454
  %v1487 = vmul.f32 %v1407, %v1458
  %v1488 = vmul.f32 %v1408, %v1462
  %v1489 = vmul.f32 %v1409, %v1466
  %v1490 = vmul.f32 %v1410, %v1470
  %v1491 = vmul.f32 %v1411, %v1474
  %v1492 = vpack.c.bf16 %v1477, %v1476
  %v1493 = vpack.c.bf16 %v1479, %v1478
  %v1494 = vpack.c.bf16 %v1481, %v1480
  %v1495 = vpack.c.bf16 %v1483, %v1482
  %v1496 = vpack.c.bf16 %v1485, %v1484
  %v1497 = vpack.c.bf16 %v1487, %v1486
  %v1498 = vpack.c.bf16 %v1489, %v1488
  %v1499 = vpack.c.bf16 %v1491, %v1490
  %s1500 = scalar_lea.vmem %s2, 320
  %v1501 = vld [vmem:[%s1500] sm:$0xf]
  %v1502 = vld [vmem:[%s1500 + $0x4] sm:$0xf]
  %v1503 = vld [vmem:[%s1500 + $0x8] sm:$0xf]
  %v1504 = vld [vmem:[%s1500 + $0xc] sm:$0xf]
  %v1505 = vld [vmem:[%s1500 + $0x10] sm:$0xf]
  %v1506 = vld [vmem:[%s1500 + $0x14] sm:$0xf]
  %v1507 = vld [vmem:[%s1500 + $0x18] sm:$0xf]
  %v1508 = vld [vmem:[%s1500 + $0x1c] sm:$0xf]
  %v1509 = vld [vmem:[%s1500 + $0x20] sm:$0xf]
  %v1510 = vld [vmem:[%s1500 + $0x24] sm:$0xf]
  %v1511 = vld [vmem:[%s1500 + $0x28] sm:$0xf]
  %v1512 = vld [vmem:[%s1500 + $0x2c] sm:$0xf]
  %v1513 = vld [vmem:[%s1500 + $0x30] sm:$0xf]
  %v1514 = vld [vmem:[%s1500 + $0x34] sm:$0xf]
  %v1515 = vld [vmem:[%s1500 + $0x38] sm:$0xf]
  %v1516 = vld [vmem:[%s1500 + $0x3c] sm:$0xf]
  %v1533 = vunpack.c.l.b16 %v1501
  %v1534 = vunpack.c.l.b16 %v1502
  %v1535 = vunpack.c.l.b16 %v1503
  %v1536 = vunpack.c.l.b16 %v1504
  %v1537 = vunpack.c.l.b16 %v1505
  %v1538 = vunpack.c.l.b16 %v1506
  %v1539 = vunpack.c.l.b16 %v1507
  %v1540 = vunpack.c.l.b16 %v1508
  %v1541 = vunpack.c.l.b16 %v1509
  %v1542 = vunpack.c.l.b16 %v1510
  %v1543 = vunpack.c.l.b16 %v1511
  %v1544 = vunpack.c.l.b16 %v1512
  %v1545 = vunpack.c.l.b16 %v1513
  %v1546 = vunpack.c.l.b16 %v1514
  %v1547 = vunpack.c.l.b16 %v1515
  %v1548 = vunpack.c.l.b16 %v1516
  %v1549 = vpack.c.b16 %v1534, %v1533
  %v1550 = vpack.c.b16 %v1536, %v1535
  %v1551 = vpack.c.b16 %v1538, %v1537
  %v1552 = vpack.c.b16 %v1540, %v1539
  %v1553 = vpack.c.b16 %v1542, %v1541
  %v1554 = vpack.c.b16 %v1544, %v1543
  %v1555 = vpack.c.b16 %v1546, %v1545
  %v1556 = vpack.c.b16 %v1548, %v1547
  %1565 = vmatpush.bf16.msra.mxu0 %v1556
  %1566 = vmatpush.bf16.msra.mxu0 %v1555
  %1567 = vmatpush.bf16.msra.mxu0 %v1554
  %1568 = vmatpush.bf16.msra.mxu0 %v1553
  %1569 = vmatpush.bf16.msra.mxu0 %v1552
  %1570 = vmatpush.bf16.msra.mxu0 %v1551
  %1571 = vmatpush.bf16.msra.mxu0 %v1550
  %1572 = vmatpush.bf16.msra.mxu0 %v1549
  %1573 = vmatmul.bf16.gmra.mxu0 %v1492
  %v1574 = vpop.f32.mrf.mxu0
  %v1575 = vadd.f32 0.0, %v1574
  %v1576 = vpop.f32.mrf.mxu0
  %v1577 = vadd.f32 0.0, %v1576
  %1578 = vmatmul.bf16.gmra.mxu0 %v1493
  %v1579 = vpop.f32.mrf.mxu0
  %v1580 = vadd.f32 0.0, %v1579
  %v1581 = vpop.f32.mrf.mxu0
  %v1582 = vadd.f32 0.0, %v1581
  %1583 = vmatmul.bf16.gmra.mxu0 %v1494
  %v1584 = vpop.f32.mrf.mxu0
  %v1585 = vadd.f32 0.0, %v1584
  %v1586 = vpop.f32.mrf.mxu0
  %v1587 = vadd.f32 0.0, %v1586
  %1588 = vmatmul.bf16.gmra.mxu0 %v1495
  %v1589 = vpop.f32.mrf.mxu0
  %v1590 = vadd.f32 0.0, %v1589
  %v1591 = vpop.f32.mrf.mxu0
  %v1592 = vadd.f32 0.0, %v1591
  %1593 = vmatmul.bf16.gmra.mxu0 %v1496
  %v1594 = vpop.f32.mrf.mxu0
  %v1595 = vadd.f32 0.0, %v1594
  %v1596 = vpop.f32.mrf.mxu0
  %v1597 = vadd.f32 0.0, %v1596
  %1598 = vmatmul.bf16.gmra.mxu0 %v1497
  %v1599 = vpop.f32.mrf.mxu0
  %v1600 = vadd.f32 0.0, %v1599
  %v1601 = vpop.f32.mrf.mxu0
  %v1602 = vadd.f32 0.0, %v1601
  %1603 = vmatmul.bf16.gmra.mxu0 %v1498
  %v1604 = vpop.f32.mrf.mxu0
  %v1605 = vadd.f32 0.0, %v1604
  %v1606 = vpop.f32.mrf.mxu0
  %v1607 = vadd.f32 0.0, %v1606
  %1608 = vmatmul.bf16.gmra.mxu0 %v1499
  %v1609 = vpop.f32.mrf.mxu0
  %v1610 = vadd.f32 0.0, %v1609
  %v1611 = vpop.f32.mrf.mxu0
  %v1612 = vadd.f32 0.0, %v1611
  %1613 = vdwg.mxu0
  %v1614 = vadd.f32 %v1380, %v1575
  %v1615 = vadd.f32 %v1381, %v1577
  %v1616 = vadd.f32 %v1382, %v1580
  %v1617 = vadd.f32 %v1383, %v1582
  %v1618 = vadd.f32 %v1384, %v1585
  %v1619 = vadd.f32 %v1385, %v1587
  %v1620 = vadd.f32 %v1386, %v1590
  %v1621 = vadd.f32 %v1387, %v1592
  %v1622 = vadd.f32 %v1388, %v1595
  %v1623 = vadd.f32 %v1389, %v1597
  %v1624 = vadd.f32 %v1390, %v1600
  %v1625 = vadd.f32 %v1391, %v1602
  %v1626 = vadd.f32 %v1392, %v1605
  %v1627 = vadd.f32 %v1393, %v1607
  %v1628 = vadd.f32 %v1394, %v1610
  %v1629 = vadd.f32 %v1395, %v1612
  %v1630 = vld [vmem:[#allocation2 + $0x17] sm:$0xff]
  %v1631 = vld [vmem:[#allocation2 + $0x1f] sm:$0xff]
  %v1632 = vld [vmem:[#allocation2 + $0x27] sm:$0xff]
  %v1633 = vld [vmem:[#allocation2 + $0x2f] sm:$0xff]
  %v1634 = vld [vmem:[#allocation2 + $0x37] sm:$0xff]
  %v1635 = vld [vmem:[#allocation2 + $0x3f] sm:$0xff]
  %v1636 = vld [vmem:[#allocation2 + $0x47] sm:$0xff]
  %v1637 = vld [vmem:[#allocation2 + $0x4f] sm:$0xff]
  %v1638 = vld [vmem:[#allocation2 + $0x57] sm:$0xff]
  %v1639 = vld [vmem:[#allocation2 + $0x5f] sm:$0xff]
  %v1640 = vld [vmem:[#allocation2 + $0x67] sm:$0xff]
  %v1641 = vld [vmem:[#allocation2 + $0x6f] sm:$0xff]
  %v1642 = vld [vmem:[#allocation2 + $0x77] sm:$0xff]
  %v1643 = vld [vmem:[#allocation2 + $0x7f] sm:$0xff]
  %v1644 = vld [vmem:[#allocation2 + $0x87] sm:$0xff]
  %v1645 = vld [vmem:[#allocation2 + $0x8f] sm:$0xff]
  %1646 = vset.pattern.permute.xlu0 6
  %1647 = vperm.xlu0 %1646, %v243
  %v1648 = vpop.permute.xlu0 %1647
  %1650 = vset.pattern.permute.xlu0 6
  %1651 = vperm.xlu0 %1650, %v244
  %v1652 = vpop.permute.xlu0 %1651
  %1654 = vset.pattern.permute.xlu0 6
  %1655 = vperm.xlu0 %1654, %v245
  %v1656 = vpop.permute.xlu0 %1655
  %1658 = vset.pattern.permute.xlu0 6
  %1659 = vperm.xlu0 %1658, %v246
  %v1660 = vpop.permute.xlu0 %1659
  %1662 = vset.pattern.permute.xlu0 6
  %1663 = vperm.xlu0 %1662, %v247
  %v1664 = vpop.permute.xlu0 %1663
  %1666 = vset.pattern.permute.xlu0 6
  %1667 = vperm.xlu0 %1666, %v248
  %v1668 = vpop.permute.xlu0 %1667
  %1670 = vset.pattern.permute.xlu0 6
  %1671 = vperm.xlu0 %1670, %v249
  %v1672 = vpop.permute.xlu0 %1671
  %1674 = vset.pattern.permute.xlu0 6
  %1675 = vperm.xlu0 %1674, %v250
  %v1676 = vpop.permute.xlu0 %1675
  %1678 = vset.pattern.permute.xlu0 6
  %1679 = vperm.xlu0 %1678, %v251
  %v1680 = vpop.permute.xlu0 %1679
  %1682 = vset.pattern.permute.xlu0 6
  %1683 = vperm.xlu0 %1682, %v252
  %v1684 = vpop.permute.xlu0 %1683
  %1686 = vset.pattern.permute.xlu0 6
  %1687 = vperm.xlu0 %1686, %v253
  %v1688 = vpop.permute.xlu0 %1687
  %1690 = vset.pattern.permute.xlu0 6
  %1691 = vperm.xlu0 %1690, %v254
  %v1692 = vpop.permute.xlu0 %1691
  %1694 = vset.pattern.permute.xlu0 6
  %1695 = vperm.xlu0 %1694, %v255
  %v1696 = vpop.permute.xlu0 %1695
  %1698 = vset.pattern.permute.xlu0 6
  %1699 = vperm.xlu0 %1698, %v256
  %v1700 = vpop.permute.xlu0 %1699
  %1702 = vset.pattern.permute.xlu0 6
  %1703 = vperm.xlu0 %1702, %v257
  %v1704 = vpop.permute.xlu0 %1703
  %1706 = vset.pattern.permute.xlu0 6
  %1707 = vperm.xlu0 %1706, %v258
  %v1708 = vpop.permute.xlu0 %1707
  %v1710 = vmul.f32 %v1630, %v1648
  %v1711 = vmul.f32 %v1631, %v1652
  %v1712 = vmul.f32 %v1632, %v1656
  %v1713 = vmul.f32 %v1633, %v1660
  %v1714 = vmul.f32 %v1634, %v1664
  %v1715 = vmul.f32 %v1635, %v1668
  %v1716 = vmul.f32 %v1636, %v1672
  %v1717 = vmul.f32 %v1637, %v1676
  %v1718 = vmul.f32 %v1638, %v1680
  %v1719 = vmul.f32 %v1639, %v1684
  %v1720 = vmul.f32 %v1640, %v1688
  %v1721 = vmul.f32 %v1641, %v1692
  %v1722 = vmul.f32 %v1642, %v1696
  %v1723 = vmul.f32 %v1643, %v1700
  %v1724 = vmul.f32 %v1644, %v1704
  %v1725 = vmul.f32 %v1645, %v1708
  %v1726 = vpack.c.bf16 %v1711, %v1710
  %v1727 = vpack.c.bf16 %v1713, %v1712
  %v1728 = vpack.c.bf16 %v1715, %v1714
  %v1729 = vpack.c.bf16 %v1717, %v1716
  %v1730 = vpack.c.bf16 %v1719, %v1718
  %v1731 = vpack.c.bf16 %v1721, %v1720
  %v1732 = vpack.c.bf16 %v1723, %v1722
  %v1733 = vpack.c.bf16 %v1725, %v1724
  %s1734 = scalar_lea.vmem %s2, 384
  %v1735 = vld [vmem:[%s1734] sm:$0xf]
  %v1736 = vld [vmem:[%s1734 + $0x4] sm:$0xf]
  %v1737 = vld [vmem:[%s1734 + $0x8] sm:$0xf]
  %v1738 = vld [vmem:[%s1734 + $0xc] sm:$0xf]
  %v1739 = vld [vmem:[%s1734 + $0x10] sm:$0xf]
  %v1740 = vld [vmem:[%s1734 + $0x14] sm:$0xf]
  %v1741 = vld [vmem:[%s1734 + $0x18] sm:$0xf]
  %v1742 = vld [vmem:[%s1734 + $0x1c] sm:$0xf]
  %v1743 = vld [vmem:[%s1734 + $0x20] sm:$0xf]
  %v1744 = vld [vmem:[%s1734 + $0x24] sm:$0xf]
  %v1745 = vld [vmem:[%s1734 + $0x28] sm:$0xf]
  %v1746 = vld [vmem:[%s1734 + $0x2c] sm:$0xf]
  %v1747 = vld [vmem:[%s1734 + $0x30] sm:$0xf]
  %v1748 = vld [vmem:[%s1734 + $0x34] sm:$0xf]
  %v1749 = vld [vmem:[%s1734 + $0x38] sm:$0xf]
  %v1750 = vld [vmem:[%s1734 + $0x3c] sm:$0xf]
  %v1767 = vunpack.c.l.b16 %v1735
  %v1768 = vunpack.c.l.b16 %v1736
  %v1769 = vunpack.c.l.b16 %v1737
  %v1770 = vunpack.c.l.b16 %v1738
  %v1771 = vunpack.c.l.b16 %v1739
  %v1772 = vunpack.c.l.b16 %v1740
  %v1773 = vunpack.c.l.b16 %v1741
  %v1774 = vunpack.c.l.b16 %v1742
  %v1775 = vunpack.c.l.b16 %v1743
  %v1776 = vunpack.c.l.b16 %v1744
  %v1777 = vunpack.c.l.b16 %v1745
  %v1778 = vunpack.c.l.b16 %v1746
  %v1779 = vunpack.c.l.b16 %v1747
  %v1780 = vunpack.c.l.b16 %v1748
  %v1781 = vunpack.c.l.b16 %v1749
  %v1782 = vunpack.c.l.b16 %v1750
  %v1783 = vpack.c.b16 %v1768, %v1767
  %v1784 = vpack.c.b16 %v1770, %v1769
  %v1785 = vpack.c.b16 %v1772, %v1771
  %v1786 = vpack.c.b16 %v1774, %v1773
  %v1787 = vpack.c.b16 %v1776, %v1775
  %v1788 = vpack.c.b16 %v1778, %v1777
  %v1789 = vpack.c.b16 %v1780, %v1779
  %v1790 = vpack.c.b16 %v1782, %v1781
  %1799 = vmatpush.bf16.msra.mxu0 %v1790
  %1800 = vmatpush.bf16.msra.mxu0 %v1789
  %1801 = vmatpush.bf16.msra.mxu0 %v1788
  %1802 = vmatpush.bf16.msra.mxu0 %v1787
  %1803 = vmatpush.bf16.msra.mxu0 %v1786
  %1804 = vmatpush.bf16.msra.mxu0 %v1785
  %1805 = vmatpush.bf16.msra.mxu0 %v1784
  %1806 = vmatpush.bf16.msra.mxu0 %v1783
  %1807 = vmatmul.bf16.gmra.mxu0 %v1726
  %v1808 = vpop.f32.mrf.mxu0
  %v1809 = vadd.f32 0.0, %v1808
  %v1810 = vpop.f32.mrf.mxu0
  %v1811 = vadd.f32 0.0, %v1810
  %1812 = vmatmul.bf16.gmra.mxu0 %v1727
  %v1813 = vpop.f32.mrf.mxu0
  %v1814 = vadd.f32 0.0, %v1813
  %v1815 = vpop.f32.mrf.mxu0
  %v1816 = vadd.f32 0.0, %v1815
  %1817 = vmatmul.bf16.gmra.mxu0 %v1728
  %v1818 = vpop.f32.mrf.mxu0
  %v1819 = vadd.f32 0.0, %v1818
  %v1820 = vpop.f32.mrf.mxu0
  %v1821 = vadd.f32 0.0, %v1820
  %1822 = vmatmul.bf16.gmra.mxu0 %v1729
  %v1823 = vpop.f32.mrf.mxu0
  %v1824 = vadd.f32 0.0, %v1823
  %v1825 = vpop.f32.mrf.mxu0
  %v1826 = vadd.f32 0.0, %v1825
  %1827 = vmatmul.bf16.gmra.mxu0 %v1730
  %v1828 = vpop.f32.mrf.mxu0
  %v1829 = vadd.f32 0.0, %v1828
  %v1830 = vpop.f32.mrf.mxu0
  %v1831 = vadd.f32 0.0, %v1830
  %1832 = vmatmul.bf16.gmra.mxu0 %v1731
  %v1833 = vpop.f32.mrf.mxu0
  %v1834 = vadd.f32 0.0, %v1833
  %v1835 = vpop.f32.mrf.mxu0
  %v1836 = vadd.f32 0.0, %v1835
  %1837 = vmatmul.bf16.gmra.mxu0 %v1732
  %v1838 = vpop.f32.mrf.mxu0
  %v1839 = vadd.f32 0.0, %v1838
  %v1840 = vpop.f32.mrf.mxu0
  %v1841 = vadd.f32 0.0, %v1840
  %1842 = vmatmul.bf16.gmra.mxu0 %v1733
  %v1843 = vpop.f32.mrf.mxu0
  %v1844 = vadd.f32 0.0, %v1843
  %v1845 = vpop.f32.mrf.mxu0
  %v1846 = vadd.f32 0.0, %v1845
  %1847 = vdwg.mxu0
  %v1848 = vadd.f32 %v1614, %v1809
  %v1849 = vadd.f32 %v1615, %v1811
  %v1850 = vadd.f32 %v1616, %v1814
  %v1851 = vadd.f32 %v1617, %v1816
  %v1852 = vadd.f32 %v1618, %v1819
  %v1853 = vadd.f32 %v1619, %v1821
  %v1854 = vadd.f32 %v1620, %v1824
  %v1855 = vadd.f32 %v1621, %v1826
  %v1856 = vadd.f32 %v1622, %v1829
  %v1857 = vadd.f32 %v1623, %v1831
  %v1858 = vadd.f32 %v1624, %v1834
  %v1859 = vadd.f32 %v1625, %v1836
  %v1860 = vadd.f32 %v1626, %v1839
  %v1861 = vadd.f32 %v1627, %v1841
  %v1862 = vadd.f32 %v1628, %v1844
  %v1863 = vadd.f32 %v1629, %v1846
  %v1864 = vld [vmem:[#allocation2 + $0x18] sm:$0xff]
  %v1865 = vld [vmem:[#allocation2 + $0x20] sm:$0xff]
  %v1866 = vld [vmem:[#allocation2 + $0x28] sm:$0xff]
  %v1867 = vld [vmem:[#allocation2 + $0x30] sm:$0xff]
  %v1868 = vld [vmem:[#allocation2 + $0x38] sm:$0xff]
  %v1869 = vld [vmem:[#allocation2 + $0x40] sm:$0xff]
  %v1870 = vld [vmem:[#allocation2 + $0x48] sm:$0xff]
  %v1871 = vld [vmem:[#allocation2 + $0x50] sm:$0xff]
  %v1872 = vld [vmem:[#allocation2 + $0x58] sm:$0xff]
  %v1873 = vld [vmem:[#allocation2 + $0x60] sm:$0xff]
  %v1874 = vld [vmem:[#allocation2 + $0x68] sm:$0xff]
  %v1875 = vld [vmem:[#allocation2 + $0x70] sm:$0xff]
  %v1876 = vld [vmem:[#allocation2 + $0x78] sm:$0xff]
  %v1877 = vld [vmem:[#allocation2 + $0x80] sm:$0xff]
  %v1878 = vld [vmem:[#allocation2 + $0x88] sm:$0xff]
  %v1879 = vld [vmem:[#allocation2 + $0x90] sm:$0xff]
  %1880 = vset.pattern.permute.xlu0 7
  %1881 = vperm.xlu0 %1880, %v243
  %v1882 = vpop.permute.xlu0 %1881
  %1884 = vset.pattern.permute.xlu0 7
  %1885 = vperm.xlu0 %1884, %v244
  %v1886 = vpop.permute.xlu0 %1885
  %1888 = vset.pattern.permute.xlu0 7
  %1889 = vperm.xlu0 %1888, %v245
  %v1890 = vpop.permute.xlu0 %1889
  %1892 = vset.pattern.permute.xlu0 7
  %1893 = vperm.xlu0 %1892, %v246
  %v1894 = vpop.permute.xlu0 %1893
  %1896 = vset.pattern.permute.xlu0 7
  %1897 = vperm.xlu0 %1896, %v247
  %v1898 = vpop.permute.xlu0 %1897
  %1900 = vset.pattern.permute.xlu0 7
  %1901 = vperm.xlu0 %1900, %v248
  %v1902 = vpop.permute.xlu0 %1901
  %1904 = vset.pattern.permute.xlu0 7
  %1905 = vperm.xlu0 %1904, %v249
  %v1906 = vpop.permute.xlu0 %1905
  %1908 = vset.pattern.permute.xlu0 7
  %1909 = vperm.xlu0 %1908, %v250
  %v1910 = vpop.permute.xlu0 %1909
  %1912 = vset.pattern.permute.xlu0 7
  %1913 = vperm.xlu0 %1912, %v251
  %v1914 = vpop.permute.xlu0 %1913
  %1916 = vset.pattern.permute.xlu0 7
  %1917 = vperm.xlu0 %1916, %v252
  %v1918 = vpop.permute.xlu0 %1917
  %1920 = vset.pattern.permute.xlu0 7
  %1921 = vperm.xlu0 %1920, %v253
  %v1922 = vpop.permute.xlu0 %1921
  %1924 = vset.pattern.permute.xlu0 7
  %1925 = vperm.xlu0 %1924, %v254
  %v1926 = vpop.permute.xlu0 %1925
  %1928 = vset.pattern.permute.xlu0 7
  %1929 = vperm.xlu0 %1928, %v255
  %v1930 = vpop.permute.xlu0 %1929
  %1932 = vset.pattern.permute.xlu0 7
  %1933 = vperm.xlu0 %1932, %v256
  %v1934 = vpop.permute.xlu0 %1933
  %1936 = vset.pattern.permute.xlu0 7
  %1937 = vperm.xlu0 %1936, %v257
  %v1938 = vpop.permute.xlu0 %1937
  %1940 = vset.pattern.permute.xlu0 7
  %1941 = vperm.xlu0 %1940, %v258
  %v1942 = vpop.permute.xlu0 %1941
  %v1944 = vmul.f32 %v1864, %v1882
  %v1945 = vmul.f32 %v1865, %v1886
  %v1946 = vmul.f32 %v1866, %v1890
  %v1947 = vmul.f32 %v1867, %v1894
  %v1948 = vmul.f32 %v1868, %v1898
  %v1949 = vmul.f32 %v1869, %v1902
  %v1950 = vmul.f32 %v1870, %v1906
  %v1951 = vmul.f32 %v1871, %v1910
  %v1952 = vmul.f32 %v1872, %v1914
  %v1953 = vmul.f32 %v1873, %v1918
  %v1954 = vmul.f32 %v1874, %v1922
  %v1955 = vmul.f32 %v1875, %v1926
  %v1956 = vmul.f32 %v1876, %v1930
  %v1957 = vmul.f32 %v1877, %v1934
  %v1958 = vmul.f32 %v1878, %v1938
  %v1959 = vmul.f32 %v1879, %v1942
  %v1960 = vpack.c.bf16 %v1945, %v1944
  %v1961 = vpack.c.bf16 %v1947, %v1946
  %v1962 = vpack.c.bf16 %v1949, %v1948
  %v1963 = vpack.c.bf16 %v1951, %v1950
  %v1964 = vpack.c.bf16 %v1953, %v1952
  %v1965 = vpack.c.bf16 %v1955, %v1954
  %v1966 = vpack.c.bf16 %v1957, %v1956
  %v1967 = vpack.c.bf16 %v1959, %v1958
  %s1968 = scalar_lea.vmem %s2, 448
  %v1969 = vld [vmem:[%s1968] sm:$0xf]
  %v1970 = vld [vmem:[%s1968 + $0x4] sm:$0xf]
  %v1971 = vld [vmem:[%s1968 + $0x8] sm:$0xf]
  %v1972 = vld [vmem:[%s1968 + $0xc] sm:$0xf]
  %v1973 = vld [vmem:[%s1968 + $0x10] sm:$0xf]
  %v1974 = vld [vmem:[%s1968 + $0x14] sm:$0xf]
  %v1975 = vld [vmem:[%s1968 + $0x18] sm:$0xf]
  %v1976 = vld [vmem:[%s1968 + $0x1c] sm:$0xf]
  %v1977 = vld [vmem:[%s1968 + $0x20] sm:$0xf]
  %v1978 = vld [vmem:[%s1968 + $0x24] sm:$0xf]
  %v1979 = vld [vmem:[%s1968 + $0x28] sm:$0xf]
  %v1980 = vld [vmem:[%s1968 + $0x2c] sm:$0xf]
  %v1981 = vld [vmem:[%s1968 + $0x30] sm:$0xf]
  %v1982 = vld [vmem:[%s1968 + $0x34] sm:$0xf]
  %v1983 = vld [vmem:[%s1968 + $0x38] sm:$0xf]
  %v1984 = vld [vmem:[%s1968 + $0x3c] sm:$0xf]
  %v2001 = vunpack.c.l.b16 %v1969
  %v2002 = vunpack.c.l.b16 %v1970
  %v2003 = vunpack.c.l.b16 %v1971
  %v2004 = vunpack.c.l.b16 %v1972
  %v2005 = vunpack.c.l.b16 %v1973
  %v2006 = vunpack.c.l.b16 %v1974
  %v2007 = vunpack.c.l.b16 %v1975
  %v2008 = vunpack.c.l.b16 %v1976
  %v2009 = vunpack.c.l.b16 %v1977
  %v2010 = vunpack.c.l.b16 %v1978
  %v2011 = vunpack.c.l.b16 %v1979
  %v2012 = vunpack.c.l.b16 %v1980
  %v2013 = vunpack.c.l.b16 %v1981
  %v2014 = vunpack.c.l.b16 %v1982
  %v2015 = vunpack.c.l.b16 %v1983
  %v2016 = vunpack.c.l.b16 %v1984
  %v2017 = vpack.c.b16 %v2002, %v2001
  %v2018 = vpack.c.b16 %v2004, %v2003
  %v2019 = vpack.c.b16 %v2006, %v2005
  %v2020 = vpack.c.b16 %v2008, %v2007
  %v2021 = vpack.c.b16 %v2010, %v2009
  %v2022 = vpack.c.b16 %v2012, %v2011
  %v2023 = vpack.c.b16 %v2014, %v2013
  %v2024 = vpack.c.b16 %v2016, %v2015
  %2033 = vmatpush.bf16.msra.mxu0 %v2024
  %2034 = vmatpush.bf16.msra.mxu0 %v2023
  %2035 = vmatpush.bf16.msra.mxu0 %v2022
  %2036 = vmatpush.bf16.msra.mxu0 %v2021
  %2037 = vmatpush.bf16.msra.mxu0 %v2020
  %2038 = vmatpush.bf16.msra.mxu0 %v2019
  %2039 = vmatpush.bf16.msra.mxu0 %v2018
  %2040 = vmatpush.bf16.msra.mxu0 %v2017
  %2041 = vmatmul.bf16.gmra.mxu0 %v1960
  %v2042 = vpop.f32.mrf.mxu0
  %v2043 = vadd.f32 0.0, %v2042
  %v2044 = vpop.f32.mrf.mxu0
  %v2045 = vadd.f32 0.0, %v2044
  %2046 = vmatmul.bf16.gmra.mxu0 %v1961
  %v2047 = vpop.f32.mrf.mxu0
  %v2048 = vadd.f32 0.0, %v2047
  %v2049 = vpop.f32.mrf.mxu0
  %v2050 = vadd.f32 0.0, %v2049
  %2051 = vmatmul.bf16.gmra.mxu0 %v1962
  %v2052 = vpop.f32.mrf.mxu0
  %v2053 = vadd.f32 0.0, %v2052
  %v2054 = vpop.f32.mrf.mxu0
  %v2055 = vadd.f32 0.0, %v2054
  %2056 = vmatmul.bf16.gmra.mxu0 %v1963
  %v2057 = vpop.f32.mrf.mxu0
  %v2058 = vadd.f32 0.0, %v2057
  %v2059 = vpop.f32.mrf.mxu0
  %v2060 = vadd.f32 0.0, %v2059
  %2061 = vmatmul.bf16.gmra.mxu0 %v1964
  %v2062 = vpop.f32.mrf.mxu0
  %v2063 = vadd.f32 0.0, %v2062
  %v2064 = vpop.f32.mrf.mxu0
  %v2065 = vadd.f32 0.0, %v2064
  %2066 = vmatmul.bf16.gmra.mxu0 %v1965
  %v2067 = vpop.f32.mrf.mxu0
  %v2068 = vadd.f32 0.0, %v2067
  %v2069 = vpop.f32.mrf.mxu0
  %v2070 = vadd.f32 0.0, %v2069
  %2071 = vmatmul.bf16.gmra.mxu0 %v1966
  %v2072 = vpop.f32.mrf.mxu0
  %v2073 = vadd.f32 0.0, %v2072
  %v2074 = vpop.f32.mrf.mxu0
  %v2075 = vadd.f32 0.0, %v2074
  %2076 = vmatmul.bf16.gmra.mxu0 %v1967
  %v2077 = vpop.f32.mrf.mxu0
  %v2078 = vadd.f32 0.0, %v2077
  %v2079 = vpop.f32.mrf.mxu0
  %v2080 = vadd.f32 0.0, %v2079
  %2081 = vdwg.mxu0
  %v2082 = vadd.f32 %v1848, %v2043
  %v2083 = vadd.f32 %v1849, %v2045
  %v2084 = vadd.f32 %v1850, %v2048
  %v2085 = vadd.f32 %v1851, %v2050
  %v2086 = vadd.f32 %v1852, %v2053
  %v2087 = vadd.f32 %v1853, %v2055
  %v2088 = vadd.f32 %v1854, %v2058
  %v2089 = vadd.f32 %v1855, %v2060
  %v2090 = vadd.f32 %v1856, %v2063
  %v2091 = vadd.f32 %v1857, %v2065
  %v2092 = vadd.f32 %v1858, %v2068
  %v2093 = vadd.f32 %v1859, %v2070
  %v2094 = vadd.f32 %v1860, %v2073
  %v2095 = vadd.f32 %v1861, %v2075
  %v2096 = vadd.f32 %v1862, %v2078
  %v2097 = vadd.f32 %v1863, %v2080
  %v2098 = vld [vmem:[#allocation2 + $0x19] sm:$0xff]
  %v2099 = vld [vmem:[#allocation2 + $0x21] sm:$0xff]
  %v2100 = vld [vmem:[#allocation2 + $0x29] sm:$0xff]
  %v2101 = vld [vmem:[#allocation2 + $0x31] sm:$0xff]
  %v2102 = vld [vmem:[#allocation2 + $0x39] sm:$0xff]
  %v2103 = vld [vmem:[#allocation2 + $0x41] sm:$0xff]
  %v2104 = vld [vmem:[#allocation2 + $0x49] sm:$0xff]
  %v2105 = vld [vmem:[#allocation2 + $0x51] sm:$0xff]
  %v2106 = vld [vmem:[#allocation2 + $0x59] sm:$0xff]
  %v2107 = vld [vmem:[#allocation2 + $0x61] sm:$0xff]
  %v2108 = vld [vmem:[#allocation2 + $0x69] sm:$0xff]
  %v2109 = vld [vmem:[#allocation2 + $0x71] sm:$0xff]
  %v2110 = vld [vmem:[#allocation2 + $0x79] sm:$0xff]
  %v2111 = vld [vmem:[#allocation2 + $0x81] sm:$0xff]
  %v2112 = vld [vmem:[#allocation2 + $0x89] sm:$0xff]
  %v2113 = vld [vmem:[#allocation2 + $0x91] sm:$0xff]
  %2114 = vset.pattern.permute.xlu0 8
  %2115 = vperm.xlu0 %2114, %v243
  %v2116 = vpop.permute.xlu0 %2115
  %2118 = vset.pattern.permute.xlu0 8
  %2119 = vperm.xlu0 %2118, %v244
  %v2120 = vpop.permute.xlu0 %2119
  %2122 = vset.pattern.permute.xlu0 8
  %2123 = vperm.xlu0 %2122, %v245
  %v2124 = vpop.permute.xlu0 %2123
  %2126 = vset.pattern.permute.xlu0 8
  %2127 = vperm.xlu0 %2126, %v246
  %v2128 = vpop.permute.xlu0 %2127
  %2130 = vset.pattern.permute.xlu0 8
  %2131 = vperm.xlu0 %2130, %v247
  %v2132 = vpop.permute.xlu0 %2131
  %2134 = vset.pattern.permute.xlu0 8
  %2135 = vperm.xlu0 %2134, %v248
  %v2136 = vpop.permute.xlu0 %2135
  %2138 = vset.pattern.permute.xlu0 8
  %2139 = vperm.xlu0 %2138, %v249
  %v2140 = vpop.permute.xlu0 %2139
  %2142 = vset.pattern.permute.xlu0 8
  %2143 = vperm.xlu0 %2142, %v250
  %v2144 = vpop.permute.xlu0 %2143
  %2146 = vset.pattern.permute.xlu0 8
  %2147 = vperm.xlu0 %2146, %v251
  %v2148 = vpop.permute.xlu0 %2147
  %2150 = vset.pattern.permute.xlu0 8
  %2151 = vperm.xlu0 %2150, %v252
  %v2152 = vpop.permute.xlu0 %2151
  %2154 = vset.pattern.permute.xlu0 8
  %2155 = vperm.xlu0 %2154, %v253
  %v2156 = vpop.permute.xlu0 %2155
  %2158 = vset.pattern.permute.xlu0 8
  %2159 = vperm.xlu0 %2158, %v254
  %v2160 = vpop.permute.xlu0 %2159
  %2162 = vset.pattern.permute.xlu0 8
  %2163 = vperm.xlu0 %2162, %v255
  %v2164 = vpop.permute.xlu0 %2163
  %2166 = vset.pattern.permute.xlu0 8
  %2167 = vperm.xlu0 %2166, %v256
  %v2168 = vpop.permute.xlu0 %2167
  %2170 = vset.pattern.permute.xlu0 8
  %2171 = vperm.xlu0 %2170, %v257
  %v2172 = vpop.permute.xlu0 %2171
  %2174 = vset.pattern.permute.xlu0 8
  %2175 = vperm.xlu0 %2174, %v258
  %v2176 = vpop.permute.xlu0 %2175
  %v2178 = vmul.f32 %v2098, %v2116
  %v2179 = vmul.f32 %v2099, %v2120
  %v2180 = vmul.f32 %v2100, %v2124
  %v2181 = vmul.f32 %v2101, %v2128
  %v2182 = vmul.f32 %v2102, %v2132
  %v2183 = vmul.f32 %v2103, %v2136
  %v2184 = vmul.f32 %v2104, %v2140
  %v2185 = vmul.f32 %v2105, %v2144
  %v2186 = vmul.f32 %v2106, %v2148
  %v2187 = vmul.f32 %v2107, %v2152
  %v2188 = vmul.f32 %v2108, %v2156
  %v2189 = vmul.f32 %v2109, %v2160
  %v2190 = vmul.f32 %v2110, %v2164
  %v2191 = vmul.f32 %v2111, %v2168
  %v2192 = vmul.f32 %v2112, %v2172
  %v2193 = vmul.f32 %v2113, %v2176
  %v2194 = vpack.c.bf16 %v2179, %v2178
  %v2195 = vpack.c.bf16 %v2181, %v2180
  %v2196 = vpack.c.bf16 %v2183, %v2182
  %v2197 = vpack.c.bf16 %v2185, %v2184
  %v2198 = vpack.c.bf16 %v2187, %v2186
  %v2199 = vpack.c.bf16 %v2189, %v2188
  %v2200 = vpack.c.bf16 %v2191, %v2190
  %v2201 = vpack.c.bf16 %v2193, %v2192
  %s2202 = scalar_lea.vmem %s2, 512
  %v2203 = vld [vmem:[%s2202] sm:$0xf]
  %v2204 = vld [vmem:[%s2202 + $0x4] sm:$0xf]
  %v2205 = vld [vmem:[%s2202 + $0x8] sm:$0xf]
  %v2206 = vld [vmem:[%s2202 + $0xc] sm:$0xf]
  %v2207 = vld [vmem:[%s2202 + $0x10] sm:$0xf]
  %v2208 = vld [vmem:[%s2202 + $0x14] sm:$0xf]
  %v2209 = vld [vmem:[%s2202 + $0x18] sm:$0xf]
  %v2210 = vld [vmem:[%s2202 + $0x1c] sm:$0xf]
  %v2211 = vld [vmem:[%s2202 + $0x20] sm:$0xf]
  %v2212 = vld [vmem:[%s2202 + $0x24] sm:$0xf]
  %v2213 = vld [vmem:[%s2202 + $0x28] sm:$0xf]
  %v2214 = vld [vmem:[%s2202 + $0x2c] sm:$0xf]
  %v2215 = vld [vmem:[%s2202 + $0x30] sm:$0xf]
  %v2216 = vld [vmem:[%s2202 + $0x34] sm:$0xf]
  %v2217 = vld [vmem:[%s2202 + $0x38] sm:$0xf]
  %v2218 = vld [vmem:[%s2202 + $0x3c] sm:$0xf]
  %v2235 = vunpack.c.l.b16 %v2203
  %v2236 = vunpack.c.l.b16 %v2204
  %v2237 = vunpack.c.l.b16 %v2205
  %v2238 = vunpack.c.l.b16 %v2206
  %v2239 = vunpack.c.l.b16 %v2207
  %v2240 = vunpack.c.l.b16 %v2208
  %v2241 = vunpack.c.l.b16 %v2209
  %v2242 = vunpack.c.l.b16 %v2210
  %v2243 = vunpack.c.l.b16 %v2211
  %v2244 = vunpack.c.l.b16 %v2212
  %v2245 = vunpack.c.l.b16 %v2213
  %v2246 = vunpack.c.l.b16 %v2214
  %v2247 = vunpack.c.l.b16 %v2215
  %v2248 = vunpack.c.l.b16 %v2216
  %v2249 = vunpack.c.l.b16 %v2217
  %v2250 = vunpack.c.l.b16 %v2218
  %v2251 = vpack.c.b16 %v2236, %v2235
  %v2252 = vpack.c.b16 %v2238, %v2237
  %v2253 = vpack.c.b16 %v2240, %v2239
  %v2254 = vpack.c.b16 %v2242, %v2241
  %v2255 = vpack.c.b16 %v2244, %v2243
  %v2256 = vpack.c.b16 %v2246, %v2245
  %v2257 = vpack.c.b16 %v2248, %v2247
  %v2258 = vpack.c.b16 %v2250, %v2249
  %2267 = vmatpush.bf16.msra.mxu0 %v2258
  %2268 = vmatpush.bf16.msra.mxu0 %v2257
  %2269 = vmatpush.bf16.msra.mxu0 %v2256
  %2270 = vmatpush.bf16.msra.mxu0 %v2255
  %2271 = vmatpush.bf16.msra.mxu0 %v2254
  %2272 = vmatpush.bf16.msra.mxu0 %v2253
  %2273 = vmatpush.bf16.msra.mxu0 %v2252
  %2274 = vmatpush.bf16.msra.mxu0 %v2251
  %2275 = vmatmul.bf16.gmra.mxu0 %v2194
  %v2276 = vpop.f32.mrf.mxu0
  %v2277 = vadd.f32 0.0, %v2276
  %v2278 = vpop.f32.mrf.mxu0
  %v2279 = vadd.f32 0.0, %v2278
  %2280 = vmatmul.bf16.gmra.mxu0 %v2195
  %v2281 = vpop.f32.mrf.mxu0
  %v2282 = vadd.f32 0.0, %v2281
  %v2283 = vpop.f32.mrf.mxu0
  %v2284 = vadd.f32 0.0, %v2283
  %2285 = vmatmul.bf16.gmra.mxu0 %v2196
  %v2286 = vpop.f32.mrf.mxu0
  %v2287 = vadd.f32 0.0, %v2286
  %v2288 = vpop.f32.mrf.mxu0
  %v2289 = vadd.f32 0.0, %v2288
  %2290 = vmatmul.bf16.gmra.mxu0 %v2197
  %v2291 = vpop.f32.mrf.mxu0
  %v2292 = vadd.f32 0.0, %v2291
  %v2293 = vpop.f32.mrf.mxu0
  %v2294 = vadd.f32 0.0, %v2293
  %2295 = vmatmul.bf16.gmra.mxu0 %v2198
  %v2296 = vpop.f32.mrf.mxu0
  %v2297 = vadd.f32 0.0, %v2296
  %v2298 = vpop.f32.mrf.mxu0
  %v2299 = vadd.f32 0.0, %v2298
  %2300 = vmatmul.bf16.gmra.mxu0 %v2199
  %v2301 = vpop.f32.mrf.mxu0
  %v2302 = vadd.f32 0.0, %v2301
  %v2303 = vpop.f32.mrf.mxu0
  %v2304 = vadd.f32 0.0, %v2303
  %2305 = vmatmul.bf16.gmra.mxu0 %v2200
  %v2306 = vpop.f32.mrf.mxu0
  %v2307 = vadd.f32 0.0, %v2306
  %v2308 = vpop.f32.mrf.mxu0
  %v2309 = vadd.f32 0.0, %v2308
  %2310 = vmatmul.bf16.gmra.mxu0 %v2201
  %v2311 = vpop.f32.mrf.mxu0
  %v2312 = vadd.f32 0.0, %v2311
  %v2313 = vpop.f32.mrf.mxu0
  %v2314 = vadd.f32 0.0, %v2313
  %2315 = vdwg.mxu0
  %v2316 = vadd.f32 %v2082, %v2277
  %v2317 = vadd.f32 %v2083, %v2279
  %v2318 = vadd.f32 %v2084, %v2282
  %v2319 = vadd.f32 %v2085, %v2284
  %v2320 = vadd.f32 %v2086, %v2287
  %v2321 = vadd.f32 %v2087, %v2289
  %v2322 = vadd.f32 %v2088, %v2292
  %v2323 = vadd.f32 %v2089, %v2294
  %v2324 = vadd.f32 %v2090, %v2297
  %v2325 = vadd.f32 %v2091, %v2299
  %v2326 = vadd.f32 %v2092, %v2302
  %v2327 = vadd.f32 %v2093, %v2304
  %v2328 = vadd.f32 %v2094, %v2307
  %v2329 = vadd.f32 %v2095, %v2309
  %v2330 = vadd.f32 %v2096, %v2312
  %v2331 = vadd.f32 %v2097, %v2314
  %v2332 = vld [vmem:[%s0] sm:$0xf]
  %v2333 = vld [vmem:[%s0 + $0x4] sm:$0xf]
  %v2334 = vld [vmem:[%s0 + $0x8] sm:$0xf]
  %v2335 = vld [vmem:[%s0 + $0xc] sm:$0xf]
  %v2336 = vld [vmem:[%s0 + $0x10] sm:$0xf]
  %v2337 = vld [vmem:[%s0 + $0x14] sm:$0xf]
  %v2338 = vld [vmem:[%s0 + $0x18] sm:$0xf]
  %v2339 = vld [vmem:[%s0 + $0x1c] sm:$0xf]
  %v2340 = vld [vmem:[%s0 + $0x20] sm:$0xf]
  %v2341 = vld [vmem:[%s0 + $0x24] sm:$0xf]
  %v2342 = vld [vmem:[%s0 + $0x28] sm:$0xf]
  %v2343 = vld [vmem:[%s0 + $0x2c] sm:$0xf]
  %v2344 = vld [vmem:[%s0 + $0x30] sm:$0xf]
  %v2345 = vld [vmem:[%s0 + $0x34] sm:$0xf]
  %v2346 = vld [vmem:[%s0 + $0x38] sm:$0xf]
  %v2347 = vld [vmem:[%s0 + $0x3c] sm:$0xf]
  %v2348 = vld [vmem:[%s3] sm:$0xf]
  %v2349 = vld [vmem:[%s3 + $0x4] sm:$0xf]
  %v2350 = vld [vmem:[%s3 + $0x8] sm:$0xf]
  %v2351 = vld [vmem:[%s3 + $0xc] sm:$0xf]
  %v2352 = vld [vmem:[%s3 + $0x10] sm:$0x3]
  %v2369 = vunpack.c.l.b16 %v2332
  %v2370 = vunpack.c.l.b16 %v2333
  %v2371 = vunpack.c.l.b16 %v2334
  %v2372 = vunpack.c.l.b16 %v2335
  %v2373 = vunpack.c.l.b16 %v2336
  %v2374 = vunpack.c.l.b16 %v2337
  %v2375 = vunpack.c.l.b16 %v2338
  %v2376 = vunpack.c.l.b16 %v2339
  %v2377 = vunpack.c.l.b16 %v2340
  %v2378 = vunpack.c.l.b16 %v2341
  %v2379 = vunpack.c.l.b16 %v2342
  %v2380 = vunpack.c.l.b16 %v2343
  %v2381 = vunpack.c.l.b16 %v2344
  %v2382 = vunpack.c.l.b16 %v2345
  %v2383 = vunpack.c.l.b16 %v2346
  %v2384 = vunpack.c.l.b16 %v2347
  %v2385 = vpack.c.b16 %v2370, %v2369
  %v2386 = vpack.c.b16 %v2372, %v2371
  %v2387 = vpack.c.b16 %v2374, %v2373
  %v2388 = vpack.c.b16 %v2376, %v2375
  %v2389 = vpack.c.b16 %v2378, %v2377
  %v2390 = vpack.c.b16 %v2380, %v2379
  %v2391 = vpack.c.b16 %v2382, %v2381
  %v2392 = vpack.c.b16 %v2384, %v2383
  %v2398 = vunpack.c.l.b16 %v2348
  %v2399 = vunpack.c.l.b16 %v2349
  %v2400 = vunpack.c.l.b16 %v2350
  %v2401 = vunpack.c.l.b16 %v2351
  %v2402 = vunpack.c.l.b16 %v2352
  %v2403 = vpack.c.b16 %v2399, %v2398
  %v2404 = vpack.c.b16 %v2401, %v2400
  %v2405 = vpack.c.b16 %v2402, %v2402
  %v2409 = vsel %vm101, %v2385, 0
  %v2412 = vsel %vm101, %v2386, 0
  %v2415 = vsel %vm101, %v2387, 0
  %v2418 = vsel %vm101, %v2388, 0
  %v2421 = vsel %vm101, %v2389, 0
  %v2424 = vsel %vm101, %v2390, 0
  %v2427 = vsel %vm101, %v2391, 0
  %v2430 = vsel %vm101, %v2392, 0
  %v2433 = vsel %vm126, %v2405, 0
  %2435 = vmatpush.bf16.msra.mxu0 0
  %2436 = vmatpush.bf16.msra.mxu0 0
  %2437 = vmatpush.bf16.msra.mxu0 0
  %2438 = vmatpush.bf16.msra.mxu0 0
  %2439 = vmatpush.bf16.msra.mxu0 0
  %2440 = vmatpush.bf16.msra.mxu0 %v2433
  %2441 = vmatpush.bf16.msra.mxu0 %v2404
  %2442 = vmatpush.bf16.msra.mxu0 %v2403
  %2443 = vmatmul.bf16.gmra.mxu0 %v2409
  %v2444 = vpop.f32.mrf.mxu0
  %v2445 = vadd.f32 0.0, %v2444
  %v2446 = vpop.f32.mrf.mxu0
  %v2447 = vadd.f32 0.0, %v2446
  %2448 = vmatmul.bf16.gmra.mxu0 %v2412
  %v2449 = vpop.f32.mrf.mxu0
  %v2450 = vadd.f32 0.0, %v2449
  %v2451 = vpop.f32.mrf.mxu0
  %v2452 = vadd.f32 0.0, %v2451
  %2453 = vmatmul.bf16.gmra.mxu0 %v2415
  %v2454 = vpop.f32.mrf.mxu0
  %v2455 = vadd.f32 0.0, %v2454
  %v2456 = vpop.f32.mrf.mxu0
  %v2457 = vadd.f32 0.0, %v2456
  %2458 = vmatmul.bf16.gmra.mxu0 %v2418
  %v2459 = vpop.f32.mrf.mxu0
  %v2460 = vadd.f32 0.0, %v2459
  %v2461 = vpop.f32.mrf.mxu0
  %v2462 = vadd.f32 0.0, %v2461
  %2463 = vmatmul.bf16.gmra.mxu0 %v2421
  %v2464 = vpop.f32.mrf.mxu0
  %v2465 = vadd.f32 0.0, %v2464
  %v2466 = vpop.f32.mrf.mxu0
  %v2467 = vadd.f32 0.0, %v2466
  %2468 = vmatmul.bf16.gmra.mxu0 %v2424
  %v2469 = vpop.f32.mrf.mxu0
  %v2470 = vadd.f32 0.0, %v2469
  %v2471 = vpop.f32.mrf.mxu0
  %v2472 = vadd.f32 0.0, %v2471
  %2473 = vmatmul.bf16.gmra.mxu0 %v2427
  %v2474 = vpop.f32.mrf.mxu0
  %v2475 = vadd.f32 0.0, %v2474
  %v2476 = vpop.f32.mrf.mxu0
  %v2477 = vadd.f32 0.0, %v2476
  %2478 = vmatmul.bf16.gmra.mxu0 %v2430
  %v2479 = vpop.f32.mrf.mxu0
  %v2480 = vadd.f32 0.0, %v2479
  %v2481 = vpop.f32.mrf.mxu0
  %v2482 = vadd.f32 0.0, %v2481
  %2483 = vdwg.mxu0
  %v2484 = vadd.f32 %v2316, %v2445
  %v2485 = vadd.f32 %v2317, %v2447
  %v2486 = vadd.f32 %v2318, %v2450
  %v2487 = vadd.f32 %v2319, %v2452
  %v2488 = vadd.f32 %v2320, %v2455
  %v2489 = vadd.f32 %v2321, %v2457
  %v2490 = vadd.f32 %v2322, %v2460
  %v2491 = vadd.f32 %v2323, %v2462
  %v2492 = vadd.f32 %v2324, %v2465
  %v2493 = vadd.f32 %v2325, %v2467
  %v2494 = vadd.f32 %v2326, %v2470
  %v2495 = vadd.f32 %v2327, %v2472
  %v2496 = vadd.f32 %v2328, %v2475
  %v2497 = vadd.f32 %v2329, %v2477
  %v2498 = vadd.f32 %v2330, %v2480
  %v2499 = vadd.f32 %v2331, %v2482
  %v2500 = vmax.f32 %v2484, 0.0
  %v2501 = vmax.f32 %v2485, 0.0
  %v2502 = vmax.f32 %v2486, 0.0
  %v2503 = vmax.f32 %v2487, 0.0
  %v2504 = vmax.f32 %v2488, 0.0
  %v2505 = vmax.f32 %v2489, 0.0
  %v2506 = vmax.f32 %v2490, 0.0
  %v2507 = vmax.f32 %v2491, 0.0
  %v2508 = vmax.f32 %v2492, 0.0
  %v2509 = vmax.f32 %v2493, 0.0
  %v2510 = vmax.f32 %v2494, 0.0
  %v2511 = vmax.f32 %v2495, 0.0
  %v2512 = vmax.f32 %v2496, 0.0
  %v2513 = vmax.f32 %v2497, 0.0
  %v2514 = vmax.f32 %v2498, 0.0
  %v2515 = vmax.f32 %v2499, 0.0
  %2516 = vxpose.xlu0.b32.start [1/16] %v2500, 128
  %2517 = vxpose.xlu0.b32.cont [2/16] %v2501, 128
  %2518 = vxpose.xlu0.b32.cont [3/16] %v2502, 128
  %2519 = vxpose.xlu0.b32.cont [4/16] %v2503, 128
  %2520 = vxpose.xlu0.b32.cont [5/16] %v2504, 128
  %2521 = vxpose.xlu0.b32.cont [6/16] %v2505, 128
  %2522 = vxpose.xlu0.b32.cont [7/16] %v2506, 128
  %2523 = vxpose.xlu0.b32.cont [8/16] %v2507, 128
  %2524 = vxpose.xlu0.b32.cont [9/16] %v2508, 128
  %2525 = vxpose.xlu0.b32.cont [10/16] %v2509, 128
  %2526 = vxpose.xlu0.b32.cont [11/16] %v2510, 128
  %2527 = vxpose.xlu0.b32.cont [12/16] %v2511, 128
  %2528 = vxpose.xlu0.b32.cont [13/16] %v2512, 128
  %2529 = vxpose.xlu0.b32.cont [14/16] %v2513, 128
  %2530 = vxpose.xlu0.b32.cont [15/16] %v2514, 128
  %2531 = vxpose.xlu0.b32.end [16/16] %v2515, 128
  %v2532 = vpop.trf.xlu0
  %v2533 = vpop.trf.xlu0
  %v2534 = vpop.trf.xlu0
  %v2535 = vpop.trf.xlu0
  %v2536 = vpop.trf.xlu0
  %v2537 = vpop.trf.xlu0
  %v2538 = vpop.trf.xlu0
  %v2539 = vpop.trf.xlu0
  %v2540 = vpop.trf.xlu0
  %v2541 = vpop.trf.xlu0
  %v2542 = vpop.trf.xlu0
  %v2543 = vpop.trf.xlu0
  %v2544 = vpop.trf.xlu0
  %v2545 = vpop.trf.xlu0
  %v2546 = vpop.trf.xlu0
  %v2547 = vpop.trf.xlu0
  %2548 = vst [vmem:[%s5] sm:$0xff] %v2532
  // Predicated region
  $region22: #{basic_block_forward.1} parent=0 // pred_check
    _
  $region23: #{basic_block_forward.1} parent=0 // pred_check_branch
    %2550 = sbr.rel (0) target = $region25
  $region24: #{basic_block_forward.1} parent=0 // pred_region
    _
  $region25: #{basic_block_forward.1} parent=0 // pred_fallthru
    _
  // Predicated region
  $region26: #{basic_block_forward.1} parent=0 // pred_check
    _
  $region27: #{basic_block_forward.1} parent=0 // pred_check_branch
    %2552 = sbr.rel (0) target = $region29
  $region28: #{basic_block_forward.1} parent=0 // pred_region
    _
  $region29: #{basic_block_forward.1} parent=0 // pred_fallthru
    _

</llo_original>
